<compile_context>
chip_gen: v5e
topology: v5e:2x2
jax: 0.10.0
libtpu: 0.0.40
codegen_flags: <defaults>
</compile_context>

<pallas_src>
import functools

import jax
import jax.numpy as jnp
from jax.experimental import pallas as pl
from jax.experimental.pallas import tpu as pltpu


# ----------------------------------------------------------------------------
# Pallas kernel: one grid step aggregates TB nodes (each with H reviews).
# ----------------------------------------------------------------------------
def _ur_agg_kernel(e_cat_ref, ur_rep_ref, w_ref, b_ref, att3_ref, out_ref,
                   *, tb, h, d):
    cd = w_ref.dtype  # MXU-input dtype (f32 or bf16); accumulation is always f32.

    # ----- packed parameters (constant index_map -> resident across the grid) --
    w1 = w_ref[0:2 * d, :]        # (2D, D)  W_r1^T
    w2 = w_ref[2 * d:3 * d, :]    # (D, D)   W_r2^T
    a1a = w_ref[3 * d:4 * d, :]   # (D, D)   att1^T, o_history half
    a1b = w_ref[4 * d:5 * d, :]   # (D, D)   att1^T, ur_rep half
    a2w = w_ref[5 * d:6 * d, :]   # (D, D)   att2^T
    b1 = b_ref[0:1, :]            # (1, D)   float32 biases
    b2 = b_ref[1:2, :]
    ba1 = b_ref[2:3, :]
    ba2 = b_ref[3:4, :]

    # ----- review tower on the (TB*H, *) slab ---------------------------------
    x = e_cat_ref[...]                                            # (TB*H, 2D)
    h1 = jnp.dot(x, w1, preferred_element_type=jnp.float32) + b1  # K = 2D matmul
    h1 = jnp.maximum(h1, 0.0)                                     # f32 activations

    o = jnp.dot(h1.astype(cd), w2, preferred_element_type=jnp.float32) + b2
    o = jnp.maximum(o, 0.0)                                       # (TB*H, D) f32

    # ----- attention MLP: cat(o_history, ur_rep) folded into per-node bias ----
    ur_bias = jnp.dot(ur_rep_ref[...], a1b,
                      preferred_element_type=jnp.float32) + ba1           # (TB, D)
    a1 = jnp.dot(o.astype(cd), a1a, preferred_element_type=jnp.float32)   # (TB*H, D)
    a1 = jnp.maximum(a1.reshape(tb, h, d) + ur_bias[:, None, :], 0.0)
    a1 = a1.reshape(tb * h, d)

    a2 = jnp.dot(a1.astype(cd), a2w, preferred_element_type=jnp.float32) + ba2
    a2 = jnp.maximum(a2, 0.0)                                     # (TB*H, D)

    # att3 bias is constant per node => cancels in softmax, dropped entirely.
    logits = jnp.dot(a2.astype(cd), att3_ref[...],
                     preferred_element_type=jnp.float32)          # (TB*H, 1)
    logits = logits.reshape(tb, h, 1)

    # softmax over the per-node history axis (H sublanes per node)
    m = jnp.max(logits, axis=1, keepdims=True)                    # (TB, 1, 1)
    e = jnp.exp(logits - m)                                       # (TB, H, 1)
    inv = pl.reciprocal(jnp.sum(e, axis=1, keepdims=True), approx=True)  # EUP vrcp
    att = e * inv                                                 # (TB, H, 1)

    # att_history[n] = (o[n]^T @ att[n])^T = sum_h att[n,h] * o[n,h,:]
    out_ref[...] = jnp.sum(att * o.reshape(tb, h, d), axis=1).astype(out_ref.dtype)


# ----------------------------------------------------------------------------
# Wrapper: embedding gathers + weight packing in plain JAX, hot path in Pallas.
# ----------------------------------------------------------------------------
def u_r_aggregation(nodes, history, labels, params, u2e, r2e, rating2e,
                    ur=True, tile_nodes=32, in_dtype=jnp.float32):
    """nodes: (B,) int32, history/labels: (B, H) int32. Returns (B, D) f32."""
    B, H = history.shape
    D = u2e.shape[1]

    # Embedding gathers + feature concat (one (B,H,2D) slab -> one K=2D matmul).
    # TODO(synk): fuse these gathers into the kernel (scalar-prefetched indices +
    # in-kernel gather / manual DMA) to remove one extra HBM pass over the slab.
    if ur:
        e_ur = jnp.take(r2e, history, axis=0)       # (B, H, D)
        ur_rep = jnp.take(u2e, nodes, axis=0)       # (B, D)
    else:
        e_ur = jnp.take(u2e, history, axis=0)
        ur_rep = jnp.take(r2e, nodes, axis=0)
    e_rating = jnp.take(rating2e, labels, axis=0)   # (B, H, D)
    e_cat = jnp.concatenate([e_ur, e_rating], axis=-1).astype(in_dtype)  # (B,H,2D)
    ur_rep = ur_rep.astype(in_dtype)

    (w_r1, b_r1, w_r2, b_r2, att1, b_att1, att2, b_att2, att3, b_att3) = params
    del b_att3  # constant per node inside the softmax => no effect on the output
    # PyTorch Linear computes y = x @ W^T + b: pack all transposed weights.
    w_pack = jnp.concatenate(
        [w_r1.T, w_r2.T, att1.T[:D], att1.T[D:], att2.T], axis=0).astype(in_dtype)
    b_pack = jnp.stack([b_r1, b_r2, b_att1, b_att2], axis=0).astype(jnp.float32)
    att3_t = att3.T.astype(in_dtype)                               # (D, 1)

    # Batch TB nodes per grid step; pad B up to a multiple of TB (8-aligned).
    TB = min(tile_nodes, B)
    TB = max(8, (TB // 8) * 8)
    n_tiles = -(-B // TB)
    B_pad = n_tiles * TB
    if B_pad != B:
        e_cat = jnp.pad(e_cat, ((0, B_pad - B), (0, 0), (0, 0)))
        ur_rep = jnp.pad(ur_rep, ((0, B_pad - B), (0, 0)))
    e_cat = e_cat.reshape(B_pad * H, 2 * D)

    kernel = functools.partial(_ur_agg_kernel, tb=TB, h=H, d=D)
    out = pl.pallas_call(
        kernel,
        out_shape=jax.ShapeDtypeStruct((B_pad, D), jnp.float32),
        grid=(n_tiles,),
        in_specs=[
            pl.BlockSpec((TB * H, 2 * D), lambda i: (i, 0)),   # e_cat slab
            pl.BlockSpec((TB, D), lambda i: (i, 0)),           # ur_rep
            pl.BlockSpec((6 * D, D), lambda i: (0, 0)),        # packed weights
            pl.BlockSpec((4, D), lambda i: (0, 0)),            # packed biases
            pl.BlockSpec((D, 1), lambda i: (0, 0)),            # att3^T
        ],
        out_specs=pl.BlockSpec((TB, D), lambda i: (i, 0)),
        compiler_params=pltpu.CompilerParams(
            dimension_semantics=("parallel",)),   # nodes independent -> v7x 2 TCs
    )(e_cat, ur_rep, w_pack, b_pack, att3_t)

    return out[:B]


# ----------------------------------------------------------------------------
# Pure-JAX reference (mirrors the PyTorch forward, eval-mode dropout).
# ----------------------------------------------------------------------------
def reference(nodes, history, labels, params, u2e, r2e, rating2e, ur=True):
    (w_r1, b_r1, w_r2, b_r2, att1, b_att1, att2, b_att2, att3, b_att3) = params
    if ur:
        e_ur = r2e[history]
        ur_rep = u2e[nodes]
    else:
        e_ur = u2e[history]
        ur_rep = r2e[nodes]
    e_rating = rating2e[labels]
    x = jnp.concatenate([e_ur, e_rating], axis=-1)                  # (B,H,2D)
    h1 = jax.nn.relu(x @ w_r1.T + b_r1)
    o = jax.nn.relu(h1 @ w_r2.T + b_r2)
    ur_b = jnp.broadcast_to(ur_rep[:, None, :], o.shape)
    a_in = jnp.concatenate([o, ur_b], axis=-1)
    a1 = jax.nn.relu(a_in @ att1.T + b_att1)
    a2 = jax.nn.relu(a1 @ att2.T + b_att2)
    logits = a2 @ att3.T + b_att3                                   # (B,H,1)
    att = jax.nn.softmax(logits, axis=1)
    return jnp.sum(att * o, axis=1)                                 # (B,D)


def _linear_init(key, out_f, in_f):
    # Matches torch.nn.Linear default init: U(-1/sqrt(in), 1/sqrt(in))
    k_w, k_b = jax.random.split(key)
    bound = 1.0 / jnp.sqrt(in_f)
    w = jax.random.uniform(k_w, (out_f, in_f), jnp.float32, -bound, bound)
    b = jax.random.uniform(k_b, (out_f,), jnp.float32, -bound, bound)
    return w, b


if __name__ == "__main__":
    key = jax.random.PRNGKey(0)
    D = 32            # embed_dim
    B = 50            # number of nodes (not a multiple of the tile -> tests padding)
    H = 8             # (fixed) history length per node
    N_USERS, N_REVIEWS, N_RATINGS = 40, 60, 5

    keys = jax.random.split(key, 12)
    u2e = jax.random.normal(keys[0], (N_USERS, D), jnp.float32)
    r2e = jax.random.normal(keys[1], (N_REVIEWS, D), jnp.float32)
    rating2e = jax.random.normal(keys[2], (N_RATINGS, D), jnp.float32)

    w_r1, b_r1 = _linear_init(keys[3], D, 2 * D)
    w_r2, b_r2 = _linear_init(keys[4], D, D)
    att1, b_att1 = _linear_init(keys[5], D, 2 * D)
    att2, b_att2 = _linear_init(keys[6], D, D)
    att3, b_att3 = _linear_init(keys[7], 1, D)
    params = (w_r1, b_r1, w_r2, b_r2, att1, b_att1, att2, b_att2, att3, b_att3)

    nodes = jax.random.randint(keys[8], (B,), 0, N_USERS, jnp.int32)
    # TODO(synk): ragged per-node history lists are padded to a fixed length H;
    # real ragged data additionally needs a length mask on the softmax / sum.
    history = jax.random.randint(keys[9], (B, H), 0, N_REVIEWS, jnp.int32)
    labels = jax.random.randint(keys[10], (B, H), 0, N_RATINGS, jnp.int32)

    ref = reference(nodes, history, labels, params, u2e, r2e, rating2e, ur=True)

    # float32 MXU inputs: only approximation is the EUP reciprocal in the softmax.
    out = u_r_aggregation(nodes, history, labels, params, u2e, r2e, rating2e,
                          ur=True, tile_nodes=32, in_dtype=jnp.float32)
    out = jax.block_until_ready(out)
    assert out.shape == (B, D)
    assert jnp.allclose(out, ref, atol=1e-3, rtol=1e-3), \
        f"f32 max abs err {jnp.max(jnp.abs(out - ref))}"

    # bfloat16 MXU inputs (half HBM traffic, higher MXU throughput), f32 accumulate.
    out_bf16 = u_r_aggregation(nodes, history, labels, params, u2e, r2e, rating2e,
                               ur=True, tile_nodes=32, in_dtype=jnp.bfloat16)
    out_bf16 = jax.block_until_ready(out_bf16)
    assert jnp.allclose(out_bf16, ref, atol=1e-1, rtol=1e-1), \
        f"bf16 max abs err {jnp.max(jnp.abs(out_bf16 - ref))}"

    print("KERNEL_OK")
</pallas_src>

<mosaic_0001>
module attributes {stable_mosaic.version = 11 : i64} {
  func.func @_ur_agg_kernel(%arg0: i32, %arg1: memref<256x64xf32, #tpu.memory_space<vmem>>, %arg2: memref<32x32xf32, #tpu.memory_space<vmem>>, %arg3: memref<192x32xf32, #tpu.memory_space<vmem>>, %arg4: memref<4x32xf32, #tpu.memory_space<vmem>>, %arg5: memref<32x1xf32, #tpu.memory_space<vmem>>, %arg6: memref<32x32xf32, #tpu.memory_space<vmem>>) attributes {dimension_semantics = [#tpu.dimension_semantics<parallel>], iteration_bounds = array<i64: 2>, scalar_prefetch = 0 : i64, scratch_operands = 0 : i64, tpu.core_type = #tpu.core_type<tc>, window_params = [{transform_indices = @transform_0, window_bounds = array<i64: 256, 64>}, {transform_indices = @transform_1, window_bounds = array<i64: 32, 32>}, {pipeline_mode = #tpu.pipeline_mode<synchronous>, transform_indices = @transform_2, window_bounds = array<i64: 192, 32>}, {pipeline_mode = #tpu.pipeline_mode<synchronous>, transform_indices = @transform_3, window_bounds = array<i64: 4, 32>}, {pipeline_mode = #tpu.pipeline_mode<synchronous>, transform_indices = @transform_4, window_bounds = array<i64: 32, 1>}, {transform_indices = @transform_5, window_bounds = array<i64: 32, 32>}]} {
    %c0 = arith.constant 0 : index
    %c0_0 = arith.constant 0 : index
    %0 = vector.load %arg3[%c0, %c0_0] : memref<192x32xf32, #tpu.memory_space<vmem>>, vector<64x32xf32>
    %c64 = arith.constant 64 : index
    %c0_1 = arith.constant 0 : index
    %1 = vector.load %arg3[%c64, %c0_1] : memref<192x32xf32, #tpu.memory_space<vmem>>, vector<32x32xf32>
    %c96 = arith.constant 96 : index
    %c0_2 = arith.constant 0 : index
    %2 = vector.load %arg3[%c96, %c0_2] : memref<192x32xf32, #tpu.memory_space<vmem>>, vector<32x32xf32>
    %c128 = arith.constant 128 : index
    %c0_3 = arith.constant 0 : index
    %3 = vector.load %arg3[%c128, %c0_3] : memref<192x32xf32, #tpu.memory_space<vmem>>, vector<32x32xf32>
    %c160 = arith.constant 160 : index
    %c0_4 = arith.constant 0 : index
    %4 = vector.load %arg3[%c160, %c0_4] : memref<192x32xf32, #tpu.memory_space<vmem>>, vector<32x32xf32>
    %c0_5 = arith.constant 0 : index
    %c0_6 = arith.constant 0 : index
    %5 = vector.load %arg4[%c0_5, %c0_6] : memref<4x32xf32, #tpu.memory_space<vmem>>, vector<1x32xf32>
    %c1 = arith.constant 1 : index
    %c0_7 = arith.constant 0 : index
    %6 = vector.load %arg4[%c1, %c0_7] : memref<4x32xf32, #tpu.memory_space<vmem>>, vector<1x32xf32>
    %c2 = arith.constant 2 : index
    %c0_8 = arith.constant 0 : index
    %7 = vector.load %arg4[%c2, %c0_8] : memref<4x32xf32, #tpu.memory_space<vmem>>, vector<1x32xf32>
    %c3 = arith.constant 3 : index
    %c0_9 = arith.constant 0 : index
    %8 = vector.load %arg4[%c3, %c0_9] : memref<4x32xf32, #tpu.memory_space<vmem>>, vector<1x32xf32>
    %c0_10 = arith.constant 0 : index
    %c0_11 = arith.constant 0 : index
    %9 = vector.load %arg1[%c0_10, %c0_11] : memref<256x64xf32, #tpu.memory_space<vmem>>, vector<256x64xf32>
    %cst = arith.constant dense<0.000000e+00> : vector<256x32xf32>
    %10 = tpu.matmul %9, %0, %cst {dimension_numbers = #tpu.dot_dimension_numbers<[1], [0], [0], [1], [0, 0, 1, 1], [], []>} : vector<256x64xf32>, vector<64x32xf32>, vector<256x32xf32> -> vector<256x32xf32>
    %11 = vector.broadcast %5 : vector<1x32xf32> to vector<256x32xf32>
    %12 = arith.addf %10, %11 : vector<256x32xf32>
    %cst_12 = arith.constant 0.000000e+00 : f32
    %13 = vector.broadcast %cst_12 : f32 to vector<256x32xf32>
    %14 = arith.maximumf %12, %13 : vector<256x32xf32>
    %cst_13 = arith.constant dense<0.000000e+00> : vector<256x32xf32>
    %15 = tpu.matmul %14, %1, %cst_13 {dimension_numbers = #tpu.dot_dimension_numbers<[1], [0], [0], [1], [0, 0, 1, 1], [], []>} : vector<256x32xf32>, vector<32x32xf32>, vector<256x32xf32> -> vector<256x32xf32>
    %16 = vector.broadcast %6 : vector<1x32xf32> to vector<256x32xf32>
    %17 = arith.addf %15, %16 : vector<256x32xf32>
    %cst_14 = arith.constant 0.000000e+00 : f32
    %18 = vector.broadcast %cst_14 : f32 to vector<256x32xf32>
    %19 = arith.maximumf %17, %18 : vector<256x32xf32>
    %c0_15 = arith.constant 0 : index
    %c0_16 = arith.constant 0 : index
    %20 = vector.load %arg2[%c0_15, %c0_16] : memref<32x32xf32, #tpu.memory_space<vmem>>, vector<32x32xf32>
    %cst_17 = arith.constant dense<0.000000e+00> : vector<32x32xf32>
    %21 = tpu.matmul %20, %3, %cst_17 {dimension_numbers = #tpu.dot_dimension_numbers<[1], [0], [0], [1], [0, 0, 1, 1], [], []>} : vector<32x32xf32>, vector<32x32xf32>, vector<32x32xf32> -> vector<32x32xf32>
    %22 = vector.broadcast %7 : vector<1x32xf32> to vector<32x32xf32>
    %23 = arith.addf %21, %22 : vector<32x32xf32>
    %cst_18 = arith.constant dense<0.000000e+00> : vector<256x32xf32>
    %24 = tpu.matmul %19, %2, %cst_18 {dimension_numbers = #tpu.dot_dimension_numbers<[1], [0], [0], [1], [0, 0, 1, 1], [], []>} : vector<256x32xf32>, vector<32x32xf32>, vector<256x32xf32> -> vector<256x32xf32>
    %25 = vector.shape_cast %24 : vector<256x32xf32> to vector<32x8x32xf32>
    %26 = vector.shape_cast %23 : vector<32x32xf32> to vector<32x1x32xf32>
    %27 = vector.broadcast %26 : vector<32x1x32xf32> to vector<32x8x32xf32>
    %28 = arith.addf %25, %27 : vector<32x8x32xf32>
    %cst_19 = arith.constant 0.000000e+00 : f32
    %29 = vector.broadcast %cst_19 : f32 to vector<32x8x32xf32>
    %30 = arith.maximumf %28, %29 : vector<32x8x32xf32>
    %31 = vector.shape_cast %30 : vector<32x8x32xf32> to vector<256x32xf32>
    %cst_20 = arith.constant dense<0.000000e+00> : vector<256x32xf32>
    %32 = tpu.matmul %31, %4, %cst_20 {dimension_numbers = #tpu.dot_dimension_numbers<[1], [0], [0], [1], [0, 0, 1, 1], [], []>} : vector<256x32xf32>, vector<32x32xf32>, vector<256x32xf32> -> vector<256x32xf32>
    %33 = vector.broadcast %8 : vector<1x32xf32> to vector<256x32xf32>
    %34 = arith.addf %32, %33 : vector<256x32xf32>
    %cst_21 = arith.constant 0.000000e+00 : f32
    %35 = vector.broadcast %cst_21 : f32 to vector<256x32xf32>
    %36 = arith.maximumf %34, %35 : vector<256x32xf32>
    %c0_22 = arith.constant 0 : index
    %c0_23 = arith.constant 0 : index
    %37 = vector.load %arg5[%c0_22, %c0_23] : memref<32x1xf32, #tpu.memory_space<vmem>>, vector<32x1xf32>
    %cst_24 = arith.constant dense<0.000000e+00> : vector<256x1xf32>
    %38 = tpu.matmul %36, %37, %cst_24 {dimension_numbers = #tpu.dot_dimension_numbers<[1], [0], [0], [1], [0, 0, 1, 1], [], []>} : vector<256x32xf32>, vector<32x1xf32>, vector<256x1xf32> -> vector<256x1xf32>
    %39 = vector.shape_cast %38 : vector<256x1xf32> to vector<32x8x1xf32>
    %cst_25 = arith.constant dense<0xFF800000> : vector<32x1xf32>
    %40 = vector.multi_reduction <maximumf>, %39, %cst_25 [1] : vector<32x8x1xf32> to vector<32x1xf32>
    %41 = vector.shape_cast %40 : vector<32x1xf32> to vector<32x1x1xf32>
    %42 = vector.broadcast %41 : vector<32x1x1xf32> to vector<32x8x1xf32>
    %43 = arith.subf %39, %42 : vector<32x8x1xf32>
    %44 = math.exp %43 : vector<32x8x1xf32>
    %cst_26 = arith.constant dense<0.000000e+00> : vector<32x1xf32>
    %45 = vector.multi_reduction <add>, %44, %cst_26 [1] : vector<32x8x1xf32> to vector<32x1xf32>
    %46 = vector.shape_cast %45 : vector<32x1xf32> to vector<32x1x1xf32>
    %47 = tpu.reciprocal %46 {approx = true} : vector<32x1x1xf32> -> vector<32x1x1xf32>
    %48 = vector.broadcast %47 : vector<32x1x1xf32> to vector<32x8x1xf32>
    %49 = arith.mulf %44, %48 : vector<32x8x1xf32>
    %50 = vector.shape_cast %19 : vector<256x32xf32> to vector<32x8x32xf32>
    %51 = vector.broadcast %49 : vector<32x8x1xf32> to vector<32x8x32xf32>
    %52 = arith.mulf %51, %50 : vector<32x8x32xf32>
    %cst_27 = arith.constant dense<0.000000e+00> : vector<32x32xf32>
    %53 = vector.multi_reduction <add>, %52, %cst_27 [1] : vector<32x8x32xf32> to vector<32x32xf32>
    %c0_28 = arith.constant 0 : index
    %c0_29 = arith.constant 0 : index
    %54 = vector.load %arg6[%c0_28, %c0_29] : memref<32x32xf32, #tpu.memory_space<vmem>>, vector<32x32xf32>
    tpu.vector_store %arg6[%c0_28, %c0_29], %53 {strides = array<i32>} : memref<32x32xf32, #tpu.memory_space<vmem>>, vector<32x32xf32>,
    return
  }
  func.func @transform_0(%arg0: i32) -> (i32, i32) {
    %c0_i32 = arith.constant 0 : i32
    %c0_i32_0 = arith.constant 0 : i32
    return %arg0, %c0_i32 : i32, i32
  }
  func.func @transform_1(%arg0: i32) -> (i32, i32) {
    %c0_i32 = arith.constant 0 : i32
    %c0_i32_0 = arith.constant 0 : i32
    return %arg0, %c0_i32 : i32, i32
  }
  func.func @transform_2(%arg0: i32) -> (i32, i32) {
    %c0_i32 = arith.constant 0 : i32
    %c0_i32_0 = arith.constant 0 : i32
    %c0_i32_1 = arith.constant 0 : i32
    return %c0_i32, %c0_i32_0 : i32, i32
  }
  func.func @transform_3(%arg0: i32) -> (i32, i32) {
    %c0_i32 = arith.constant 0 : i32
    %c0_i32_0 = arith.constant 0 : i32
    %c0_i32_1 = arith.constant 0 : i32
    return %c0_i32, %c0_i32_0 : i32, i32
  }
  func.func @transform_4(%arg0: i32) -> (i32, i32) {
    %c0_i32 = arith.constant 0 : i32
    %c0_i32_0 = arith.constant 0 : i32
    %c0_i32_1 = arith.constant 0 : i32
    return %c0_i32, %c0_i32_0 : i32, i32
  }
  func.func @transform_5(%arg0: i32) -> (i32, i32) {
    %c0_i32 = arith.constant 0 : i32
    %c0_i32_0 = arith.constant 0 : i32
    return %arg0, %c0_i32 : i32, i32
  }
}

</mosaic_0001>

<llo_original>
// kernel: tpu_custom_call.1
$region0: #{tpu_custom_call.1}
  #allocation0 [shape = 'u32[]', space=smem, size = 0x4, offset = 0x4, fixed_abs, tag = 'smem constant byte address 0x4 - core index']
  #allocation1 [shape = 'u32[72,128]{1,0:T(1,128)}', space=vmem, size = 0x9000, scoped, tag = 'internal scratch']
  %s0 = inlined_call_operand.vmem [shape: f32[512,64], index: 0, kind: input, shape index: {}]
  %s1 = inlined_call_operand.vmem [shape: f32[64,32], index: 1, kind: input, shape index: {}]
  %s2 = inlined_call_operand.vmem [shape: f32[192,32], index: 2, kind: input, shape index: {}]
  %s3 = inlined_call_operand.vmem [shape: f32[4,32], index: 3, kind: input, shape index: {}]
  %s4 = inlined_call_operand.vmem [shape: f32[32,1], index: 4, kind: input, shape index: {}]
  %s5 = inlined_call_operand.vmem [shape: f32[64,32], index: 5, kind: output, shape index: {}]
  %s6 = sld [smem:[#allocation0]]
  $region53: #{tpu_custom_call.1} parent=0
    _
  %s8 = ssub.s32 1, %s6
  %s9 = scalar_select 0, %s8, %s6
  loop: start=0, step=1, limit=4
  $region2: #{tpu_custom_call.1} parent=0 // loop_pre_header
    _
  $region3: #{tpu_custom_call.1} parent=0 // loop_header
    %s11 = sphi 0, %s15
    %p12 = scmp.ge.s32.totalorder %s11, 4
    %s21 = sphi 0, %s23
    %s24 = sphi 0, %s21
    %s25 = sphi 0, %s24
    %s41 = sphi 0, %s25
    %s47 = sphi 0, %s49
    %s50 = sphi 0, %s47
    %s51 = sphi 0, %s50
    %s67 = sphi 0, %s51
    %s71 = sphi 0, %s71
    %s73 = sphi 0, %s71
    %s74 = sphi 0, %s73
    %s88 = sphi 0, %s74
    %s92 = sphi 0, %s92
    %s94 = sphi 0, %s92
    %s95 = sphi 0, %s94
    %s109 = sphi 0, %s95
    %s113 = sphi 0, %s113
    %s115 = sphi 0, %s113
    %s116 = sphi 0, %s115
    %s130 = sphi 0, %s116
    %s136 = sphi 0, %s138
    %s139 = sphi 0, %s136
    %s140 = sphi 0, %s139
    %s156 = sphi 0, %s140
  $region4: #{tpu_custom_call.1} parent=0 // loop_header_branch
    %14 = sbr.rel (%p12) target = $region8
  $region5: #{tpu_custom_call.1} parent=0 // loop_body
    %s16 = ssub.s32 %s11, 1
    %s17 = ssub.s32 %s11, 2
    %s18 = sadd.s32 %s11, 1
    %s19 = ssub.s32 %s11, %s18
    %p20 = scmp.eq.s32.totalorder %s19, 0
    %s22 = sadd.s32 %s21, 1
    %s23 = scalar_select %p20, %s21, %s22
    %p26 = pneg %p20
    %p27 = scmp.eq.s32.totalorder %s11, 1
    %p28 = por %p26, %p27
    %p29 = scmp.ne.s32.totalorder %s21, %s24
    %p30 = scmp.eq.s32.totalorder %s11, 0
    %p31 = por %p29, %p30
    %p32 = scmp.ne.s32.totalorder %s21, %s24
    %p33 = scmp.eq.s32.totalorder %s16, 1
    %p34 = por %p32, %p33
    %p35 = scmp.ne.s32.totalorder %s24, %s25
    %p36 = scmp.eq.s32.totalorder %s16, 0
    %p37 = por %p35, %p36
    %p38 = scmp.ne.s32.totalorder %s24, %s25
    %p39 = scmp.eq.s32.totalorder %s17, 1
    %p40 = por %p38, %p39
    %p42 = scmp.ne.s32.totalorder %s25, %s41
    %p43 = scmp.eq.s32.totalorder %s17, 0
    %p44 = por %p42, %p43
    %s45 = ssub.s32 %s11, %s18
    %p46 = scmp.eq.s32.totalorder %s45, 0
    %s48 = sadd.s32 %s47, 1
    %s49 = scalar_select %p46, %s47, %s48
    %p52 = pneg %p46
    %p53 = scmp.eq.s32.totalorder %s11, 1
    %p54 = por %p52, %p53
    %p55 = scmp.ne.s32.totalorder %s47, %s50
    %p56 = scmp.eq.s32.totalorder %s11, 0
    %p57 = por %p55, %p56
    %p58 = scmp.ne.s32.totalorder %s47, %s50
    %p59 = scmp.eq.s32.totalorder %s16, 1
    %p60 = por %p58, %p59
    %p61 = scmp.ne.s32.totalorder %s50, %s51
    %p62 = scmp.eq.s32.totalorder %s16, 0
    %p63 = por %p61, %p62
    %p64 = scmp.ne.s32.totalorder %s50, %s51
    %p65 = scmp.eq.s32.totalorder %s17, 1
    %p66 = por %p64, %p65
    %p68 = scmp.ne.s32.totalorder %s51, %s67
    %p69 = scmp.eq.s32.totalorder %s17, 0
    %p70 = por %p68, %p69
    %s72 = sadd.s32 %s71, 1
    %p75 = scmp.eq.s32.totalorder %s11, 1
    %p76 = scmp.ne.s32.totalorder %s71, %s73
    %p77 = scmp.eq.s32.totalorder %s11, 0
    %p78 = por %p76, %p77
    %p79 = scmp.ne.s32.totalorder %s71, %s73
    %p80 = scmp.eq.s32.totalorder %s16, 1
    %p81 = por %p79, %p80
    %p82 = scmp.ne.s32.totalorder %s73, %s74
    %p83 = scmp.eq.s32.totalorder %s16, 0
    %p84 = por %p82, %p83
    %p85 = scmp.ne.s32.totalorder %s73, %s74
    %p86 = scmp.eq.s32.totalorder %s17, 1
    %p87 = por %p85, %p86
    %p89 = scmp.ne.s32.totalorder %s74, %s88
    %p90 = scmp.eq.s32.totalorder %s17, 0
    %p91 = por %p89, %p90
    %s93 = sadd.s32 %s92, 1
    %p96 = scmp.eq.s32.totalorder %s11, 1
    %p97 = scmp.ne.s32.totalorder %s92, %s94
    %p98 = scmp.eq.s32.totalorder %s11, 0
    %p99 = por %p97, %p98
    %p100 = scmp.ne.s32.totalorder %s92, %s94
    %p101 = scmp.eq.s32.totalorder %s16, 1
    %p102 = por %p100, %p101
    %p103 = scmp.ne.s32.totalorder %s94, %s95
    %p104 = scmp.eq.s32.totalorder %s16, 0
    %p105 = por %p103, %p104
    %p106 = scmp.ne.s32.totalorder %s94, %s95
    %p107 = scmp.eq.s32.totalorder %s17, 1
    %p108 = por %p106, %p107
    %p110 = scmp.ne.s32.totalorder %s95, %s109
    %p111 = scmp.eq.s32.totalorder %s17, 0
    %p112 = por %p110, %p111
    %s114 = sadd.s32 %s113, 1
    %p117 = scmp.eq.s32.totalorder %s11, 1
    %p118 = scmp.ne.s32.totalorder %s113, %s115
    %p119 = scmp.eq.s32.totalorder %s11, 0
    %p120 = por %p118, %p119
    %p121 = scmp.ne.s32.totalorder %s113, %s115
    %p122 = scmp.eq.s32.totalorder %s16, 1
    %p123 = por %p121, %p122
    %p124 = scmp.ne.s32.totalorder %s115, %s116
    %p125 = scmp.eq.s32.totalorder %s16, 0
    %p126 = por %p124, %p125
    %p127 = scmp.ne.s32.totalorder %s115, %s116
    %p128 = scmp.eq.s32.totalorder %s17, 1
    %p129 = por %p127, %p128
    %p131 = scmp.ne.s32.totalorder %s116, %s130
    %p132 = scmp.eq.s32.totalorder %s17, 0
    %p133 = por %p131, %p132
    %s134 = ssub.s32 %s11, %s18
    %p135 = scmp.eq.s32.totalorder %s134, 0
    %s137 = sadd.s32 %s136, 1
    %s138 = scalar_select %p135, %s136, %s137
    %p141 = pneg %p135
    %p142 = scmp.eq.s32.totalorder %s11, 1
    %p143 = por %p141, %p142
    %p144 = scmp.ne.s32.totalorder %s136, %s139
    %p145 = scmp.eq.s32.totalorder %s11, 0
    %p146 = por %p144, %p145
    %p147 = scmp.ne.s32.totalorder %s136, %s139
    %p148 = scmp.eq.s32.totalorder %s16, 1
    %p149 = por %p147, %p148
    %p150 = scmp.ne.s32.totalorder %s139, %s140
    %p151 = scmp.eq.s32.totalorder %s16, 0
    %p152 = por %p150, %p151
    %p153 = scmp.ne.s32.totalorder %s139, %s140
    %p154 = scmp.eq.s32.totalorder %s17, 1
    %p155 = por %p153, %p154
    %p157 = scmp.ne.s32.totalorder %s140, %s156
    %p158 = scmp.eq.s32.totalorder %s17, 0
    %p159 = por %p157, %p158
    %p160 = scmp.le.s32.totalorder 1, %s11
    %p161 = scmp.lt.s32.totalorder %s11, 3
    %p162 = pnand %p160, %p161
    %p163 = pneg %p162
    // Predicated region
    $region9: #{tpu_custom_call.1} parent=5 // pred_check
      _
    $region10: #{tpu_custom_call.1} parent=5 // pred_check_branch
      %165 = sbr.rel (%p162) target = $region12
    $region11: #{tpu_custom_call.1} parent=5 // pred_region
      %s166 = ssub.s32 %s11, 1
      // Predicated region
      $region13: #{tpu_custom_call.1} parent=11 // pred_check
        %p167 = pneg %p84
      $region14: #{tpu_custom_call.1} parent=11 // pred_check_branch
        %169 = sbr.rel (%p167) target = $region16
      $region15: #{tpu_custom_call.1} parent=11 // pred_region
        _
      $region16: #{tpu_custom_call.1} parent=11 // pred_fallthru
        _
      // Predicated region
      $region17: #{tpu_custom_call.1} parent=11 // pred_check
        %p170 = pneg %p105
      $region18: #{tpu_custom_call.1} parent=11 // pred_check_branch
        %172 = sbr.rel (%p170) target = $region20
      $region19: #{tpu_custom_call.1} parent=11 // pred_region
        _
      $region20: #{tpu_custom_call.1} parent=11 // pred_fallthru
        _
      // Predicated region
      $region21: #{tpu_custom_call.1} parent=11 // pred_check
        %p173 = pneg %p126
      $region22: #{tpu_custom_call.1} parent=11 // pred_check_branch
        %175 = sbr.rel (%p173) target = $region24
      $region23: #{tpu_custom_call.1} parent=11 // pred_region
        _
      $region24: #{tpu_custom_call.1} parent=11 // pred_fallthru
        _
    $region12: #{tpu_custom_call.1} parent=5 // pred_fallthru
      _
    %p176 = scmp.lt.s32.totalorder %s11, 2
    // Predicated region
    $region25: #{tpu_custom_call.1} parent=5 // pred_check
      %p177 = pneg %p176
    $region26: #{tpu_custom_call.1} parent=5 // pred_check_branch
      %179 = sbr.rel (%p177) target = $region28
    $region27: #{tpu_custom_call.1} parent=5 // pred_region
      // Predicated region
      $region29: #{tpu_custom_call.1} parent=27 // pred_check
        %p180 = pneg %p31
      $region30: #{tpu_custom_call.1} parent=27 // pred_check_branch
        %182 = sbr.rel (%p180) target = $region32
      $region31: #{tpu_custom_call.1} parent=27 // pred_region
        %s183 = smul.u32 32, %s11
        %p184 = scmp.lt.s32.totalorder %s183, 63
        %s185 = scalar_select %p184, %s183, 63
        %s186 = smul.addr %s185, 8
        %s187 = scalar_lea.vmem %s0, %s186
        %s188 = smul.u32 32, %s11
      $region32: #{tpu_custom_call.1} parent=27 // pred_fallthru
        _
      // Predicated region
      $region33: #{tpu_custom_call.1} parent=27 // pred_check
        %p189 = pneg %p57
      $region34: #{tpu_custom_call.1} parent=27 // pred_check_branch
        %191 = sbr.rel (%p189) target = $region36
      $region35: #{tpu_custom_call.1} parent=27 // pred_region
        %s192 = smul.u32 4, %s11
        %p193 = scmp.lt.s32.totalorder %s192, 7
        %s194 = scalar_select %p193, %s192, 7
        %s195 = smul.addr %s194, 8
        %s196 = scalar_lea.vmem %s1, %s195
        %s197 = smul.u32 4, %s11
      $region36: #{tpu_custom_call.1} parent=27 // pred_fallthru
        _
    $region28: #{tpu_custom_call.1} parent=5 // pred_fallthru
      _
    %p198 = scmp.le.s32.totalorder 1, %s11
    %p199 = scmp.lt.s32.totalorder %s11, 3
    %p200 = pnand %p198, %p199
    %p201 = pneg %p200
    // Predicated region
    $region37: #{tpu_custom_call.1} parent=5 // pred_check
      _
    $region38: #{tpu_custom_call.1} parent=5 // pred_check_branch
      %203 = sbr.rel (%p200) target = $region40
    $region39: #{tpu_custom_call.1} parent=5 // pred_region
      %s204 = ssub.s32 %s11, 1
      %s205 = smul.u32 32, %s16
      %p206 = scmp.lt.s32.totalorder %s205, 63
      %s207 = scalar_select %p206, %s205, 63
      %s208 = smul.addr %s207, 8
      %s209 = scalar_lea.vmem %s0, %s208
      %p210 = pneg %p37
      %p211 = pneg %p34
      %s212 = smul.u32 4, %s16
      %p213 = scmp.lt.s32.totalorder %s212, 7
      %s214 = scalar_select %p213, %s212, 7
      %s215 = smul.addr %s214, 8
      %s216 = scalar_lea.vmem %s1, %s215
      %p217 = pneg %p63
      %p218 = pneg %p60
      %p219 = pneg %p84
      %p220 = pneg %p81
      %p221 = pneg %p105
      %p222 = pneg %p102
      %p223 = pneg %p126
      %p224 = pneg %p123
      %p225 = pneg %p152
      %p226 = pneg %p149
      %s227 = smul.u32 4, %s16
      %p228 = scmp.lt.s32.totalorder %s227, 7
      %s229 = scalar_select %p228, %s227, 7
      %s230 = smul.addr %s229, 8
      %s231 = scalar_lea.vmem %s5, %s230
      %s232 = smul.u32 32, %s16
      %p233 = scmp.lt.s32.totalorder %s232, 63
      %s234 = scalar_select %p233, %s232, 63
      %s235 = smul.addr %s234, 8
      %s236 = scalar_lea.vmem %s0, %s235
      %s237 = smul.u32 32, %s16
      %s238 = smul.u32 4, %s16
      %p239 = scmp.lt.s32.totalorder %s238, 7
      %s240 = scalar_select %p239, %s238, 7
      %s241 = smul.addr %s240, 8
      %s242 = scalar_lea.vmem %s1, %s241
      %s243 = smul.u32 4, %s16
      %s244 = smul.u32 4, %s16
      %p245 = scmp.lt.s32.totalorder %s244, 7
      %s246 = scalar_select %p245, %s244, 7
      %s247 = smul.addr %s246, 8
      %s248 = scalar_lea.vmem %s5, %s247
      %s249 = smul.u32 4, %s16
      %v250 = vld [vmem:[%s2] sm:$0xff]
      %v251 = vld [vmem:[%s2 + $0x8] sm:$0xff]
      %v252 = vld [vmem:[%s2 + $0x10] sm:$0xff]
      %v253 = vld [vmem:[%s2 + $0x18] sm:$0xff]
      %v254 = vld [vmem:[%s2 + $0x20] sm:$0xff]
      %v255 = vld [vmem:[%s2 + $0x28] sm:$0xff]
      %v256 = vld [vmem:[%s2 + $0x30] sm:$0xff]
      %v257 = vld [vmem:[%s2 + $0x38] sm:$0xff]
      %v258 = vld [vmem:[%s2 + $0x40] sm:$0xff]
      %v259 = vld [vmem:[%s2 + $0x48] sm:$0xff]
      %v260 = vld [vmem:[%s2 + $0x50] sm:$0xff]
      %v261 = vld [vmem:[%s2 + $0x58] sm:$0xff]
      %v262 = vld [vmem:[%s2 + $0x60] sm:$0xff]
      %v263 = vld [vmem:[%s2 + $0x68] sm:$0xff]
      %v264 = vld [vmem:[%s2 + $0x70] sm:$0xff]
      %v265 = vld [vmem:[%s2 + $0x78] sm:$0xff]
      %v266 = vld [vmem:[%s2 + $0x80] sm:$0xff]
      %v267 = vld [vmem:[%s2 + $0x88] sm:$0xff]
      %v268 = vld [vmem:[%s2 + $0x90] sm:$0xff]
      %v269 = vld [vmem:[%s2 + $0x98] sm:$0xff]
      %v270 = vld [vmem:[%s2 + $0xa0] sm:$0xff]
      %v271 = vld [vmem:[%s2 + $0xa8] sm:$0xff]
      %v272 = vld [vmem:[%s2 + $0xb0] sm:$0xff]
      %v273 = vld [vmem:[%s2 + $0xb8] sm:$0xff]
      %v274 = vld [vmem:[%s3] sm:$0x1]
      %v275 = vld [vmem:[%s3 + $0x1] sm:$0x1]
      %v276 = vld [vmem:[%s3 + $0x2] sm:$0x1]
      %v277 = vld [vmem:[%s3 + $0x3] sm:$0x1]
      %v278 = vld [vmem:[%s236] sm:$0xff]
      %v279 = vld [vmem:[%s236 + $0x8] sm:$0xff]
      %v280 = vld [vmem:[%s236 + $0x10] sm:$0xff]
      %v281 = vld [vmem:[%s236 + $0x18] sm:$0xff]
      %v282 = vld [vmem:[%s236 + $0x20] sm:$0xff]
      %v283 = vld [vmem:[%s236 + $0x28] sm:$0xff]
      %v284 = vld [vmem:[%s236 + $0x30] sm:$0xff]
      %v285 = vld [vmem:[%s236 + $0x38] sm:$0xff]
      %v286 = vld [vmem:[%s236 + $0x40] sm:$0xff]
      %v287 = vld [vmem:[%s236 + $0x48] sm:$0xff]
      %v288 = vld [vmem:[%s236 + $0x50] sm:$0xff]
      %v289 = vld [vmem:[%s236 + $0x58] sm:$0xff]
      %v290 = vld [vmem:[%s236 + $0x60] sm:$0xff]
      %v291 = vld [vmem:[%s236 + $0x68] sm:$0xff]
      %v292 = vld [vmem:[%s236 + $0x70] sm:$0xff]
      %v293 = vld [vmem:[%s236 + $0x78] sm:$0xff]
      %v294 = vld [vmem:[%s236 + $0x80] sm:$0xff]
      %v295 = vld [vmem:[%s236 + $0x88] sm:$0xff]
      %v296 = vld [vmem:[%s236 + $0x90] sm:$0xff]
      %v297 = vld [vmem:[%s236 + $0x98] sm:$0xff]
      %v298 = vld [vmem:[%s236 + $0xa0] sm:$0xff]
      %v299 = vld [vmem:[%s236 + $0xa8] sm:$0xff]
      %v300 = vld [vmem:[%s236 + $0xb0] sm:$0xff]
      %v301 = vld [vmem:[%s236 + $0xb8] sm:$0xff]
      %v302 = vld [vmem:[%s236 + $0xc0] sm:$0xff]
      %v303 = vld [vmem:[%s236 + $0xc8] sm:$0xff]
      %v304 = vld [vmem:[%s236 + $0xd0] sm:$0xff]
      %v305 = vld [vmem:[%s236 + $0xd8] sm:$0xff]
      %v306 = vld [vmem:[%s236 + $0xe0] sm:$0xff]
      %v307 = vld [vmem:[%s236 + $0xe8] sm:$0xff]
      %v308 = vld [vmem:[%s236 + $0xf0] sm:$0xff]
      %v309 = vld [vmem:[%s236 + $0xf8] sm:$0xff]
      %v310 = vperm.slane %v274, 0
      %vm311 = vcmask 523264
      %v313 = vsel %vm311, %v278, 0
      %v316 = vsel %vm311, %v279, 0
      %v319 = vsel %vm311, %v280, 0
      %v322 = vsel %vm311, %v281, 0
      %v325 = vsel %vm311, %v282, 0
      %v328 = vsel %vm311, %v283, 0
      %v331 = vsel %vm311, %v284, 0
      %v334 = vsel %vm311, %v285, 0
      %v337 = vsel %vm311, %v286, 0
      %v340 = vsel %vm311, %v287, 0
      %v343 = vsel %vm311, %v288, 0
      %v346 = vsel %vm311, %v289, 0
      %v349 = vsel %vm311, %v290, 0
      %v352 = vsel %vm311, %v291, 0
      %v355 = vsel %vm311, %v292, 0
      %v358 = vsel %vm311, %v293, 0
      %v361 = vsel %vm311, %v294, 0
      %v364 = vsel %vm311, %v295, 0
      %v367 = vsel %vm311, %v296, 0
      %v370 = vsel %vm311, %v297, 0
      %v373 = vsel %vm311, %v298, 0
      %v376 = vsel %vm311, %v299, 0
      %v379 = vsel %vm311, %v300, 0
      %v382 = vsel %vm311, %v301, 0
      %v385 = vsel %vm311, %v302, 0
      %v388 = vsel %vm311, %v303, 0
      %v391 = vsel %vm311, %v304, 0
      %v394 = vsel %vm311, %v305, 0
      %v397 = vsel %vm311, %v306, 0
      %v400 = vsel %vm311, %v307, 0
      %v403 = vsel %vm311, %v308, 0
      %v406 = vsel %vm311, %v309, 0
      %408 = vmatpush.msra.mxu0 0.0
      %409 = vmatpush.msra.mxu0 0.0
      %410 = vmatpush.msra.mxu0 0.0
      %411 = vmatpush.msra.mxu0 0.0
      %412 = vmatpush.msra.mxu0 0.0
      %413 = vmatpush.msra.mxu0 0.0
      %414 = vmatpush.msra.mxu0 0.0
      %415 = vmatpush.msra.mxu0 0.0
      %416 = vmatpush.msra.mxu0 %v257
      %417 = vmatpush.msra.mxu0 %v256
      %418 = vmatpush.msra.mxu0 %v255
      %419 = vmatpush.msra.mxu0 %v254
      %420 = vmatpush.msra.mxu0 %v253
      %421 = vmatpush.msra.mxu0 %v252
      %422 = vmatpush.msra.mxu0 %v251
      %423 = vmatpush.msra.mxu0 %v250
      %424 = vmatmul.f32.gmra.mxu0 %v313
      %v425 = vpop.f32.mrf.mxu0
      %v426 = vadd.f32 %v310, %v425
      %427 = vmatmul.f32.gmra.mxu0 %v316
      %v428 = vpop.f32.mrf.mxu0
      %v429 = vadd.f32 %v310, %v428
      %430 = vmatmul.f32.gmra.mxu0 %v319
      %v431 = vpop.f32.mrf.mxu0
      %v432 = vadd.f32 %v310, %v431
      %433 = vmatmul.f32.gmra.mxu0 %v322
      %v434 = vpop.f32.mrf.mxu0
      %v435 = vadd.f32 %v310, %v434
      %436 = vmatmul.f32.gmra.mxu0 %v325
      %v437 = vpop.f32.mrf.mxu0
      %v438 = vadd.f32 %v310, %v437
      %439 = vmatmul.f32.gmra.mxu0 %v328
      %v440 = vpop.f32.mrf.mxu0
      %v441 = vadd.f32 %v310, %v440
      %442 = vmatmul.f32.gmra.mxu0 %v331
      %v443 = vpop.f32.mrf.mxu0
      %v444 = vadd.f32 %v310, %v443
      %445 = vmatmul.f32.gmra.mxu0 %v334
      %v446 = vpop.f32.mrf.mxu0
      %v447 = vadd.f32 %v310, %v446
      %448 = vmatmul.f32.gmra.mxu0 %v337
      %v449 = vpop.f32.mrf.mxu0
      %v450 = vadd.f32 %v310, %v449
      %451 = vmatmul.f32.gmra.mxu0 %v340
      %v452 = vpop.f32.mrf.mxu0
      %v453 = vadd.f32 %v310, %v452
      %454 = vmatmul.f32.gmra.mxu0 %v343
      %v455 = vpop.f32.mrf.mxu0
      %v456 = vadd.f32 %v310, %v455
      %457 = vmatmul.f32.gmra.mxu0 %v346
      %v458 = vpop.f32.mrf.mxu0
      %v459 = vadd.f32 %v310, %v458
      %460 = vmatmul.f32.gmra.mxu0 %v349
      %v461 = vpop.f32.mrf.mxu0
      %v462 = vadd.f32 %v310, %v461
      %463 = vmatmul.f32.gmra.mxu0 %v352
      %v464 = vpop.f32.mrf.mxu0
      %v465 = vadd.f32 %v310, %v464
      %466 = vmatmul.f32.gmra.mxu0 %v355
      %v467 = vpop.f32.mrf.mxu0
      %v468 = vadd.f32 %v310, %v467
      %469 = vmatmul.f32.gmra.mxu0 %v358
      %v470 = vpop.f32.mrf.mxu0
      %v471 = vadd.f32 %v310, %v470
      %472 = vmatmul.f32.gmra.mxu0 %v361
      %v473 = vpop.f32.mrf.mxu0
      %v474 = vadd.f32 %v310, %v473
      %475 = vmatmul.f32.gmra.mxu0 %v364
      %v476 = vpop.f32.mrf.mxu0
      %v477 = vadd.f32 %v310, %v476
      %478 = vmatmul.f32.gmra.mxu0 %v367
      %v479 = vpop.f32.mrf.mxu0
      %v480 = vadd.f32 %v310, %v479
      %481 = vmatmul.f32.gmra.mxu0 %v370
      %v482 = vpop.f32.mrf.mxu0
      %v483 = vadd.f32 %v310, %v482
      %484 = vmatmul.f32.gmra.mxu0 %v373
      %v485 = vpop.f32.mrf.mxu0
      %v486 = vadd.f32 %v310, %v485
      %487 = vmatmul.f32.gmra.mxu0 %v376
      %v488 = vpop.f32.mrf.mxu0
      %v489 = vadd.f32 %v310, %v488
      %490 = vmatmul.f32.gmra.mxu0 %v379
      %v491 = vpop.f32.mrf.mxu0
      %v492 = vadd.f32 %v310, %v491
      %493 = vmatmul.f32.gmra.mxu0 %v382
      %v494 = vpop.f32.mrf.mxu0
      %v495 = vadd.f32 %v310, %v494
      %496 = vmatmul.f32.gmra.mxu0 %v385
      %v497 = vpop.f32.mrf.mxu0
      %v498 = vadd.f32 %v310, %v497
      %499 = vmatmul.f32.gmra.mxu0 %v388
      %v500 = vpop.f32.mrf.mxu0
      %v501 = vadd.f32 %v310, %v500
      %502 = vmatmul.f32.gmra.mxu0 %v391
      %v503 = vpop.f32.mrf.mxu0
      %v504 = vadd.f32 %v310, %v503
      %505 = vmatmul.f32.gmra.mxu0 %v394
      %v506 = vpop.f32.mrf.mxu0
      %v507 = vadd.f32 %v310, %v506
      %508 = vmatmul.f32.gmra.mxu0 %v397
      %v509 = vpop.f32.mrf.mxu0
      %v510 = vadd.f32 %v310, %v509
      %511 = vmatmul.f32.gmra.mxu0 %v400
      %v512 = vpop.f32.mrf.mxu0
      %v513 = vadd.f32 %v310, %v512
      %514 = vmatmul.f32.gmra.mxu0 %v403
      %v515 = vpop.f32.mrf.mxu0
      %v516 = vadd.f32 %v310, %v515
      %517 = vmatmul.f32.gmra.mxu0 %v406
      %v518 = vpop.f32.mrf.mxu0
      %v519 = vadd.f32 %v310, %v518
      %520 = vdwg.mxu0
      %v521 = vmax.f32 %v426, 0.0
      %v522 = vmax.f32 %v429, 0.0
      %v523 = vmax.f32 %v432, 0.0
      %v524 = vmax.f32 %v435, 0.0
      %v525 = vmax.f32 %v438, 0.0
      %v526 = vmax.f32 %v441, 0.0
      %v527 = vmax.f32 %v444, 0.0
      %v528 = vmax.f32 %v447, 0.0
      %v529 = vmax.f32 %v450, 0.0
      %v530 = vmax.f32 %v453, 0.0
      %v531 = vmax.f32 %v456, 0.0
      %v532 = vmax.f32 %v459, 0.0
      %v533 = vmax.f32 %v462, 0.0
      %v534 = vmax.f32 %v465, 0.0
      %v535 = vmax.f32 %v468, 0.0
      %v536 = vmax.f32 %v471, 0.0
      %v537 = vmax.f32 %v474, 0.0
      %v538 = vmax.f32 %v477, 0.0
      %v539 = vmax.f32 %v480, 0.0
      %v540 = vmax.f32 %v483, 0.0
      %v541 = vmax.f32 %v486, 0.0
      %v542 = vmax.f32 %v489, 0.0
      %v543 = vmax.f32 %v492, 0.0
      %v544 = vmax.f32 %v495, 0.0
      %v545 = vmax.f32 %v498, 0.0
      %v546 = vmax.f32 %v501, 0.0
      %v547 = vmax.f32 %v504, 0.0
      %v548 = vmax.f32 %v507, 0.0
      %v549 = vmax.f32 %v510, 0.0
      %v550 = vmax.f32 %v513, 0.0
      %v551 = vmax.f32 %v516, 0.0
      %v552 = vmax.f32 %v519, 0.0
      %v553 = vperm.slane %v275, 0
      %vm554 = vcmask 261120
      %v556 = vsel %vm554, %v521, 0
      %v559 = vsel %vm554, %v522, 0
      %v562 = vsel %vm554, %v523, 0
      %v565 = vsel %vm554, %v524, 0
      %v568 = vsel %vm554, %v525, 0
      %v571 = vsel %vm554, %v526, 0
      %v574 = vsel %vm554, %v527, 0
      %v577 = vsel %vm554, %v528, 0
      %v580 = vsel %vm554, %v529, 0
      %v583 = vsel %vm554, %v530, 0
      %v586 = vsel %vm554, %v531, 0
      %v589 = vsel %vm554, %v532, 0
      %v592 = vsel %vm554, %v533, 0
      %v595 = vsel %vm554, %v534, 0
      %v598 = vsel %vm554, %v535, 0
      %v601 = vsel %vm554, %v536, 0
      %v604 = vsel %vm554, %v537, 0
      %v607 = vsel %vm554, %v538, 0
      %v610 = vsel %vm554, %v539, 0
      %v613 = vsel %vm554, %v540, 0
      %v616 = vsel %vm554, %v541, 0
      %v619 = vsel %vm554, %v542, 0
      %v622 = vsel %vm554, %v543, 0
      %v625 = vsel %vm554, %v544, 0
      %v628 = vsel %vm554, %v545, 0
      %v631 = vsel %vm554, %v546, 0
      %v634 = vsel %vm554, %v547, 0
      %v637 = vsel %vm554, %v548, 0
      %v640 = vsel %vm554, %v549, 0
      %v643 = vsel %vm554, %v550, 0
      %v646 = vsel %vm554, %v551, 0
      %v649 = vsel %vm554, %v552, 0
      %651 = vmatpush.msra.mxu0 0.0
      %652 = vmatpush.msra.mxu0 0.0
      %653 = vmatpush.msra.mxu0 0.0
      %654 = vmatpush.msra.mxu0 0.0
      %655 = vmatpush.msra.mxu0 0.0
      %656 = vmatpush.msra.mxu0 0.0
      %657 = vmatpush.msra.mxu0 0.0
      %658 = vmatpush.msra.mxu0 0.0
      %659 = vmatpush.msra.mxu0 0.0
      %660 = vmatpush.msra.mxu0 0.0
      %661 = vmatpush.msra.mxu0 0.0
      %662 = vmatpush.msra.mxu0 0.0
      %663 = vmatpush.msra.mxu0 %v261
      %664 = vmatpush.msra.mxu0 %v260
      %665 = vmatpush.msra.mxu0 %v259
      %666 = vmatpush.msra.mxu0 %v258
      %667 = vmatmul.f32.gmra.mxu0 %v556
      %v668 = vpop.f32.mrf.mxu0
      %v669 = vadd.f32 %v553, %v668
      %670 = vmatmul.f32.gmra.mxu0 %v559
      %v671 = vpop.f32.mrf.mxu0
      %v672 = vadd.f32 %v553, %v671
      %673 = vmatmul.f32.gmra.mxu0 %v562
      %v674 = vpop.f32.mrf.mxu0
      %v675 = vadd.f32 %v553, %v674
      %676 = vmatmul.f32.gmra.mxu0 %v565
      %v677 = vpop.f32.mrf.mxu0
      %v678 = vadd.f32 %v553, %v677
      %679 = vmatmul.f32.gmra.mxu0 %v568
      %v680 = vpop.f32.mrf.mxu0
      %v681 = vadd.f32 %v553, %v680
      %682 = vmatmul.f32.gmra.mxu0 %v571
      %v683 = vpop.f32.mrf.mxu0
      %v684 = vadd.f32 %v553, %v683
      %685 = vmatmul.f32.gmra.mxu0 %v574
      %v686 = vpop.f32.mrf.mxu0
      %v687 = vadd.f32 %v553, %v686
      %688 = vmatmul.f32.gmra.mxu0 %v577
      %v689 = vpop.f32.mrf.mxu0
      %v690 = vadd.f32 %v553, %v689
      %691 = vmatmul.f32.gmra.mxu0 %v580
      %v692 = vpop.f32.mrf.mxu0
      %v693 = vadd.f32 %v553, %v692
      %694 = vmatmul.f32.gmra.mxu0 %v583
      %v695 = vpop.f32.mrf.mxu0
      %v696 = vadd.f32 %v553, %v695
      %697 = vmatmul.f32.gmra.mxu0 %v586
      %v698 = vpop.f32.mrf.mxu0
      %v699 = vadd.f32 %v553, %v698
      %700 = vmatmul.f32.gmra.mxu0 %v589
      %v701 = vpop.f32.mrf.mxu0
      %v702 = vadd.f32 %v553, %v701
      %703 = vmatmul.f32.gmra.mxu0 %v592
      %v704 = vpop.f32.mrf.mxu0
      %v705 = vadd.f32 %v553, %v704
      %706 = vmatmul.f32.gmra.mxu0 %v595
      %v707 = vpop.f32.mrf.mxu0
      %v708 = vadd.f32 %v553, %v707
      %709 = vmatmul.f32.gmra.mxu0 %v598
      %v710 = vpop.f32.mrf.mxu0
      %v711 = vadd.f32 %v553, %v710
      %712 = vmatmul.f32.gmra.mxu0 %v601
      %v713 = vpop.f32.mrf.mxu0
      %v714 = vadd.f32 %v553, %v713
      %715 = vmatmul.f32.gmra.mxu0 %v604
      %v716 = vpop.f32.mrf.mxu0
      %v717 = vadd.f32 %v553, %v716
      %718 = vmatmul.f32.gmra.mxu0 %v607
      %v719 = vpop.f32.mrf.mxu0
      %v720 = vadd.f32 %v553, %v719
      %721 = vmatmul.f32.gmra.mxu0 %v610
      %v722 = vpop.f32.mrf.mxu0
      %v723 = vadd.f32 %v553, %v722
      %724 = vmatmul.f32.gmra.mxu0 %v613
      %v725 = vpop.f32.mrf.mxu0
      %v726 = vadd.f32 %v553, %v725
      %727 = vmatmul.f32.gmra.mxu0 %v616
      %v728 = vpop.f32.mrf.mxu0
      %v729 = vadd.f32 %v553, %v728
      %730 = vmatmul.f32.gmra.mxu0 %v619
      %v731 = vpop.f32.mrf.mxu0
      %v732 = vadd.f32 %v553, %v731
      %733 = vmatmul.f32.gmra.mxu0 %v622
      %v734 = vpop.f32.mrf.mxu0
      %v735 = vadd.f32 %v553, %v734
      %736 = vmatmul.f32.gmra.mxu0 %v625
      %v737 = vpop.f32.mrf.mxu0
      %v738 = vadd.f32 %v553, %v737
      %739 = vmatmul.f32.gmra.mxu0 %v628
      %v740 = vpop.f32.mrf.mxu0
      %v741 = vadd.f32 %v553, %v740
      %742 = vmatmul.f32.gmra.mxu0 %v631
      %v743 = vpop.f32.mrf.mxu0
      %v744 = vadd.f32 %v553, %v743
      %745 = vmatmul.f32.gmra.mxu0 %v634
      %v746 = vpop.f32.mrf.mxu0
      %v747 = vadd.f32 %v553, %v746
      %748 = vmatmul.f32.gmra.mxu0 %v637
      %v749 = vpop.f32.mrf.mxu0
      %v750 = vadd.f32 %v553, %v749
      %751 = vmatmul.f32.gmra.mxu0 %v640
      %v752 = vpop.f32.mrf.mxu0
      %v753 = vadd.f32 %v553, %v752
      %754 = vmatmul.f32.gmra.mxu0 %v643
      %v755 = vpop.f32.mrf.mxu0
      %v756 = vadd.f32 %v553, %v755
      %757 = vmatmul.f32.gmra.mxu0 %v646
      %v758 = vpop.f32.mrf.mxu0
      %v759 = vadd.f32 %v553, %v758
      %760 = vmatmul.f32.gmra.mxu0 %v649
      %v761 = vpop.f32.mrf.mxu0
      %v762 = vadd.f32 %v553, %v761
      %763 = vdwg.mxu0
      %v764 = vmax.f32 %v669, 0.0
      %v765 = vmax.f32 %v672, 0.0
      %v766 = vmax.f32 %v675, 0.0
      %v767 = vmax.f32 %v678, 0.0
      %v768 = vmax.f32 %v681, 0.0
      %v769 = vmax.f32 %v684, 0.0
      %v770 = vmax.f32 %v687, 0.0
      %v771 = vmax.f32 %v690, 0.0
      %v772 = vmax.f32 %v693, 0.0
      %v773 = vmax.f32 %v696, 0.0
      %v774 = vmax.f32 %v699, 0.0
      %v775 = vmax.f32 %v702, 0.0
      %v776 = vmax.f32 %v705, 0.0
      %v777 = vmax.f32 %v708, 0.0
      %v778 = vmax.f32 %v711, 0.0
      %v779 = vmax.f32 %v714, 0.0
      %v780 = vmax.f32 %v717, 0.0
      %v781 = vmax.f32 %v720, 0.0
      %v782 = vmax.f32 %v723, 0.0
      %v783 = vmax.f32 %v726, 0.0
      %v784 = vmax.f32 %v729, 0.0
      %v785 = vmax.f32 %v732, 0.0
      %v786 = vmax.f32 %v735, 0.0
      %v787 = vmax.f32 %v738, 0.0
      %v788 = vmax.f32 %v741, 0.0
      %v789 = vmax.f32 %v744, 0.0
      %v790 = vmax.f32 %v747, 0.0
      %v791 = vmax.f32 %v750, 0.0
      %v792 = vmax.f32 %v753, 0.0
      %v793 = vmax.f32 %v756, 0.0
      %v794 = vmax.f32 %v759, 0.0
      %v795 = vmax.f32 %v762, 0.0
      %v796 = vld [vmem:[%s242] sm:$0xff]
      %v797 = vld [vmem:[%s242 + $0x8] sm:$0xff]
      %v798 = vld [vmem:[%s242 + $0x10] sm:$0xff]
      %v799 = vld [vmem:[%s242 + $0x18] sm:$0xff]
      %v800 = vperm.slane %v276, 0
      %v802 = vsel %vm554, %v796, 0
      %v805 = vsel %vm554, %v797, 0
      %v808 = vsel %vm554, %v798, 0
      %v811 = vsel %vm554, %v799, 0
      %813 = vmatpush.msra.mxu0 0.0
      %814 = vmatpush.msra.mxu0 0.0
      %815 = vmatpush.msra.mxu0 0.0
      %816 = vmatpush.msra.mxu0 0.0
      %817 = vmatpush.msra.mxu0 0.0
      %818 = vmatpush.msra.mxu0 0.0
      %819 = vmatpush.msra.mxu0 0.0
      %820 = vmatpush.msra.mxu0 0.0
      %821 = vmatpush.msra.mxu0 0.0
      %822 = vmatpush.msra.mxu0 0.0
      %823 = vmatpush.msra.mxu0 0.0
      %824 = vmatpush.msra.mxu0 0.0
      %825 = vmatpush.msra.mxu0 %v269
      %826 = vmatpush.msra.mxu0 %v268
      %827 = vmatpush.msra.mxu0 %v267
      %828 = vmatpush.msra.mxu0 %v266
      %829 = vmatmul.f32.gmra.mxu0 %v802
      %v830 = vpop.f32.mrf.mxu0
      %v831 = vadd.f32 %v800, %v830
      %832 = vmatmul.f32.gmra.mxu0 %v805
      %v833 = vpop.f32.mrf.mxu0
      %v834 = vadd.f32 %v800, %v833
      %835 = vmatmul.f32.gmra.mxu0 %v808
      %v836 = vpop.f32.mrf.mxu0
      %v837 = vadd.f32 %v800, %v836
      %838 = vmatmul.f32.gmra.mxu0 %v811
      %v839 = vpop.f32.mrf.mxu0
      %v840 = vadd.f32 %v800, %v839
      %841 = vdwg.mxu0
      %v843 = vsel %vm554, %v764, 0
      %v846 = vsel %vm554, %v765, 0
      %v849 = vsel %vm554, %v766, 0
      %v852 = vsel %vm554, %v767, 0
      %v855 = vsel %vm554, %v768, 0
      %v858 = vsel %vm554, %v769, 0
      %v861 = vsel %vm554, %v770, 0
      %v864 = vsel %vm554, %v771, 0
      %v867 = vsel %vm554, %v772, 0
      %v870 = vsel %vm554, %v773, 0
      %v873 = vsel %vm554, %v774, 0
      %v876 = vsel %vm554, %v775, 0
      %v879 = vsel %vm554, %v776, 0
      %v882 = vsel %vm554, %v777, 0
      %v885 = vsel %vm554, %v778, 0
      %v888 = vsel %vm554, %v779, 0
      %v891 = vsel %vm554, %v780, 0
      %v894 = vsel %vm554, %v781, 0
      %v897 = vsel %vm554, %v782, 0
      %v900 = vsel %vm554, %v783, 0
      %v903 = vsel %vm554, %v784, 0
      %v906 = vsel %vm554, %v785, 0
      %v909 = vsel %vm554, %v786, 0
      %v912 = vsel %vm554, %v787, 0
      %v915 = vsel %vm554, %v788, 0
      %v918 = vsel %vm554, %v789, 0
      %v921 = vsel %vm554, %v790, 0
      %v924 = vsel %vm554, %v791, 0
      %v927 = vsel %vm554, %v792, 0
      %v930 = vsel %vm554, %v793, 0
      %v933 = vsel %vm554, %v794, 0
      %v936 = vsel %vm554, %v795, 0
      %938 = vmatpush.msra.mxu0 0.0
      %939 = vmatpush.msra.mxu0 0.0
      %940 = vmatpush.msra.mxu0 0.0
      %941 = vmatpush.msra.mxu0 0.0
      %942 = vmatpush.msra.mxu0 0.0
      %943 = vmatpush.msra.mxu0 0.0
      %944 = vmatpush.msra.mxu0 0.0
      %945 = vmatpush.msra.mxu0 0.0
      %946 = vmatpush.msra.mxu0 0.0
      %947 = vmatpush.msra.mxu0 0.0
      %948 = vmatpush.msra.mxu0 0.0
      %949 = vmatpush.msra.mxu0 0.0
      %950 = vmatpush.msra.mxu0 %v265
      %951 = vmatpush.msra.mxu0 %v264
      %952 = vmatpush.msra.mxu0 %v263
      %953 = vmatpush.msra.mxu0 %v262
      %954 = vmatmul.f32.gmra.mxu0 %v843
      %v955 = vpop.f32.mrf.mxu0
      %v956 = vadd.f32 0.0, %v955
      %957 = vmatmul.f32.gmra.mxu0 %v846
      %v958 = vpop.f32.mrf.mxu0
      %v959 = vadd.f32 0.0, %v958
      %960 = vmatmul.f32.gmra.mxu0 %v849
      %v961 = vpop.f32.mrf.mxu0
      %v962 = vadd.f32 0.0, %v961
      %963 = vmatmul.f32.gmra.mxu0 %v852
      %v964 = vpop.f32.mrf.mxu0
      %v965 = vadd.f32 0.0, %v964
      %966 = vmatmul.f32.gmra.mxu0 %v855
      %v967 = vpop.f32.mrf.mxu0
      %v968 = vadd.f32 0.0, %v967
      %969 = vmatmul.f32.gmra.mxu0 %v858
      %v970 = vpop.f32.mrf.mxu0
      %v971 = vadd.f32 0.0, %v970
      %972 = vmatmul.f32.gmra.mxu0 %v861
      %v973 = vpop.f32.mrf.mxu0
      %v974 = vadd.f32 0.0, %v973
      %975 = vmatmul.f32.gmra.mxu0 %v864
      %v976 = vpop.f32.mrf.mxu0
      %v977 = vadd.f32 0.0, %v976
      %978 = vmatmul.f32.gmra.mxu0 %v867
      %v979 = vpop.f32.mrf.mxu0
      %v980 = vadd.f32 0.0, %v979
      %981 = vmatmul.f32.gmra.mxu0 %v870
      %v982 = vpop.f32.mrf.mxu0
      %v983 = vadd.f32 0.0, %v982
      %984 = vmatmul.f32.gmra.mxu0 %v873
      %v985 = vpop.f32.mrf.mxu0
      %v986 = vadd.f32 0.0, %v985
      %987 = vmatmul.f32.gmra.mxu0 %v876
      %v988 = vpop.f32.mrf.mxu0
      %v989 = vadd.f32 0.0, %v988
      %990 = vmatmul.f32.gmra.mxu0 %v879
      %v991 = vpop.f32.mrf.mxu0
      %v992 = vadd.f32 0.0, %v991
      %993 = vmatmul.f32.gmra.mxu0 %v882
      %v994 = vpop.f32.mrf.mxu0
      %v995 = vadd.f32 0.0, %v994
      %996 = vmatmul.f32.gmra.mxu0 %v885
      %v997 = vpop.f32.mrf.mxu0
      %v998 = vadd.f32 0.0, %v997
      %999 = vmatmul.f32.gmra.mxu0 %v888
      %v1000 = vpop.f32.mrf.mxu0
      %v1001 = vadd.f32 0.0, %v1000
      %1002 = vmatmul.f32.gmra.mxu0 %v891
      %v1003 = vpop.f32.mrf.mxu0
      %v1004 = vadd.f32 0.0, %v1003
      %1005 = vmatmul.f32.gmra.mxu0 %v894
      %v1006 = vpop.f32.mrf.mxu0
      %v1007 = vadd.f32 0.0, %v1006
      %1008 = vmatmul.f32.gmra.mxu0 %v897
      %v1009 = vpop.f32.mrf.mxu0
      %v1010 = vadd.f32 0.0, %v1009
      %1011 = vmatmul.f32.gmra.mxu0 %v900
      %v1012 = vpop.f32.mrf.mxu0
      %v1013 = vadd.f32 0.0, %v1012
      %1014 = vmatmul.f32.gmra.mxu0 %v903
      %v1015 = vpop.f32.mrf.mxu0
      %v1016 = vadd.f32 0.0, %v1015
      %1017 = vmatmul.f32.gmra.mxu0 %v906
      %v1018 = vpop.f32.mrf.mxu0
      %v1019 = vadd.f32 0.0, %v1018
      %1020 = vmatmul.f32.gmra.mxu0 %v909
      %v1021 = vpop.f32.mrf.mxu0
      %v1022 = vadd.f32 0.0, %v1021
      %1023 = vmatmul.f32.gmra.mxu0 %v912
      %v1024 = vpop.f32.mrf.mxu0
      %v1025 = vadd.f32 0.0, %v1024
      %1026 = vmatmul.f32.gmra.mxu0 %v915
      %v1027 = vpop.f32.mrf.mxu0
      %v1028 = vadd.f32 0.0, %v1027
      %1029 = vmatmul.f32.gmra.mxu0 %v918
      %v1030 = vpop.f32.mrf.mxu0
      %v1031 = vadd.f32 0.0, %v1030
      %1032 = vmatmul.f32.gmra.mxu0 %v921
      %v1033 = vpop.f32.mrf.mxu0
      %v1034 = vadd.f32 0.0, %v1033
      %1035 = vmatmul.f32.gmra.mxu0 %v924
      %v1036 = vpop.f32.mrf.mxu0
      %v1037 = vadd.f32 0.0, %v1036
      %1038 = vmatmul.f32.gmra.mxu0 %v927
      %v1039 = vpop.f32.mrf.mxu0
      %v1040 = vadd.f32 0.0, %v1039
      %1041 = vmatmul.f32.gmra.mxu0 %v930
      %v1042 = vpop.f32.mrf.mxu0
      %v1043 = vadd.f32 0.0, %v1042
      %1044 = vmatmul.f32.gmra.mxu0 %v933
      %v1045 = vpop.f32.mrf.mxu0
      %v1046 = vadd.f32 0.0, %v1045
      %1047 = vmatmul.f32.gmra.mxu0 %v936
      %v1048 = vpop.f32.mrf.mxu0
      %v1049 = vadd.f32 0.0, %v1048
      %1050 = vdwg.mxu0
      %v1055 = vrot.slane %v831, 1
      %v1056 = vrot.slane %v831, 2
      %v1057 = vrot.slane %v831, 3
      %v1058 = vrot.slane %v831, 4
      %v1059 = vrot.slane %v831, 5
      %v1060 = vrot.slane %v831, 6
      %v1061 = vrot.slane %v831, 7
      %v1062 = vrot.slane %v834, 1
      %v1063 = vrot.slane %v834, 2
      %v1064 = vrot.slane %v834, 3
      %v1065 = vrot.slane %v834, 4
      %v1066 = vrot.slane %v834, 5
      %v1067 = vrot.slane %v834, 6
      %v1068 = vrot.slane %v834, 7
      %v1069 = vrot.slane %v837, 1
      %v1070 = vrot.slane %v837, 2
      %v1071 = vrot.slane %v837, 3
      %v1072 = vrot.slane %v837, 4
      %v1073 = vrot.slane %v837, 5
      %v1074 = vrot.slane %v837, 6
      %v1075 = vrot.slane %v837, 7
      %v1076 = vrot.slane %v840, 1
      %v1077 = vrot.slane %v840, 2
      %v1078 = vrot.slane %v840, 3
      %v1079 = vrot.slane %v840, 4
      %v1080 = vrot.slane %v840, 5
      %v1081 = vrot.slane %v840, 6
      %v1082 = vrot.slane %v840, 7
      %v1083 = vperm.slane %v831, 0
      %v1084 = vperm.slane %v1055, 0
      %v1085 = vperm.slane %v1056, 0
      %v1086 = vperm.slane %v1057, 0
      %v1087 = vperm.slane %v1058, 0
      %v1088 = vperm.slane %v1059, 0
      %v1089 = vperm.slane %v1060, 0
      %v1090 = vperm.slane %v1061, 0
      %v1091 = vperm.slane %v834, 0
      %v1092 = vperm.slane %v1062, 0
      %v1093 = vperm.slane %v1063, 0
      %v1094 = vperm.slane %v1064, 0
      %v1095 = vperm.slane %v1065, 0
      %v1096 = vperm.slane %v1066, 0
      %v1097 = vperm.slane %v1067, 0
      %v1098 = vperm.slane %v1068, 0
      %v1099 = vperm.slane %v837, 0
      %v1100 = vperm.slane %v1069, 0
      %v1101 = vperm.slane %v1070, 0
      %v1102 = vperm.slane %v1071, 0
      %v1103 = vperm.slane %v1072, 0
      %v1104 = vperm.slane %v1073, 0
      %v1105 = vperm.slane %v1074, 0
      %v1106 = vperm.slane %v1075, 0
      %v1107 = vperm.slane %v840, 0
      %v1108 = vperm.slane %v1076, 0
      %v1109 = vperm.slane %v1077, 0
      %v1110 = vperm.slane %v1078, 0
      %v1111 = vperm.slane %v1079, 0
      %v1112 = vperm.slane %v1080, 0
      %v1113 = vperm.slane %v1081, 0
      %v1114 = vperm.slane %v1082, 0
      %v1147 = vadd.f32 %v956, %v1083
      %v1148 = vadd.f32 %v959, %v1084
      %v1149 = vadd.f32 %v962, %v1085
      %v1150 = vadd.f32 %v965, %v1086
      %v1151 = vadd.f32 %v968, %v1087
      %v1152 = vadd.f32 %v971, %v1088
      %v1153 = vadd.f32 %v974, %v1089
      %v1154 = vadd.f32 %v977, %v1090
      %v1155 = vadd.f32 %v980, %v1091
      %v1156 = vadd.f32 %v983, %v1092
      %v1157 = vadd.f32 %v986, %v1093
      %v1158 = vadd.f32 %v989, %v1094
      %v1159 = vadd.f32 %v992, %v1095
      %v1160 = vadd.f32 %v995, %v1096
      %v1161 = vadd.f32 %v998, %v1097
      %v1162 = vadd.f32 %v1001, %v1098
      %v1163 = vadd.f32 %v1004, %v1099
      %v1164 = vadd.f32 %v1007, %v1100
      %v1165 = vadd.f32 %v1010, %v1101
      %v1166 = vadd.f32 %v1013, %v1102
      %v1167 = vadd.f32 %v1016, %v1103
      %v1168 = vadd.f32 %v1019, %v1104
      %v1169 = vadd.f32 %v1022, %v1105
      %v1170 = vadd.f32 %v1025, %v1106
      %v1171 = vadd.f32 %v1028, %v1107
      %v1172 = vadd.f32 %v1031, %v1108
      %v1173 = vadd.f32 %v1034, %v1109
      %v1174 = vadd.f32 %v1037, %v1110
      %v1175 = vadd.f32 %v1040, %v1111
      %v1176 = vadd.f32 %v1043, %v1112
      %v1177 = vadd.f32 %v1046, %v1113
      %v1178 = vadd.f32 %v1049, %v1114
      %v1179 = vmax.f32 %v1147, 0.0
      %v1180 = vmax.f32 %v1148, 0.0
      %v1181 = vmax.f32 %v1149, 0.0
      %v1182 = vmax.f32 %v1150, 0.0
      %v1183 = vmax.f32 %v1151, 0.0
      %v1184 = vmax.f32 %v1152, 0.0
      %v1185 = vmax.f32 %v1153, 0.0
      %v1186 = vmax.f32 %v1154, 0.0
      %v1187 = vmax.f32 %v1155, 0.0
      %v1188 = vmax.f32 %v1156, 0.0
      %v1189 = vmax.f32 %v1157, 0.0
      %v1190 = vmax.f32 %v1158, 0.0
      %v1191 = vmax.f32 %v1159, 0.0
      %v1192 = vmax.f32 %v1160, 0.0
      %v1193 = vmax.f32 %v1161, 0.0
      %v1194 = vmax.f32 %v1162, 0.0
      %v1195 = vmax.f32 %v1163, 0.0
      %v1196 = vmax.f32 %v1164, 0.0
      %v1197 = vmax.f32 %v1165, 0.0
      %v1198 = vmax.f32 %v1166, 0.0
      %v1199 = vmax.f32 %v1167, 0.0
      %v1200 = vmax.f32 %v1168, 0.0
      %v1201 = vmax.f32 %v1169, 0.0
      %v1202 = vmax.f32 %v1170, 0.0
      %v1203 = vmax.f32 %v1171, 0.0
      %v1204 = vmax.f32 %v1172, 0.0
      %v1205 = vmax.f32 %v1173, 0.0
      %v1206 = vmax.f32 %v1174, 0.0
      %v1207 = vmax.f32 %v1175, 0.0
      %v1208 = vmax.f32 %v1176, 0.0
      %v1209 = vmax.f32 %v1177, 0.0
      %v1210 = vmax.f32 %v1178, 0.0
      %v1211 = vperm.slane %v277, 0
      %v1213 = vsel %vm554, %v1179, 0
      %v1216 = vsel %vm554, %v1180, 0
      %v1219 = vsel %vm554, %v1181, 0
      %v1222 = vsel %vm554, %v1182, 0
      %v1225 = vsel %vm554, %v1183, 0
      %v1228 = vsel %vm554, %v1184, 0
      %v1231 = vsel %vm554, %v1185, 0
      %v1234 = vsel %vm554, %v1186, 0
      %v1237 = vsel %vm554, %v1187, 0
      %v1240 = vsel %vm554, %v1188, 0
      %v1243 = vsel %vm554, %v1189, 0
      %v1246 = vsel %vm554, %v1190, 0
      %v1249 = vsel %vm554, %v1191, 0
      %v1252 = vsel %vm554, %v1192, 0
      %v1255 = vsel %vm554, %v1193, 0
      %v1258 = vsel %vm554, %v1194, 0
      %v1261 = vsel %vm554, %v1195, 0
      %v1264 = vsel %vm554, %v1196, 0
      %v1267 = vsel %vm554, %v1197, 0
      %v1270 = vsel %vm554, %v1198, 0
      %v1273 = vsel %vm554, %v1199, 0
      %v1276 = vsel %vm554, %v1200, 0
      %v1279 = vsel %vm554, %v1201, 0
      %v1282 = vsel %vm554, %v1202, 0
      %v1285 = vsel %vm554, %v1203, 0
      %v1288 = vsel %vm554, %v1204, 0
      %v1291 = vsel %vm554, %v1205, 0
      %v1294 = vsel %vm554, %v1206, 0
      %v1297 = vsel %vm554, %v1207, 0
      %v1300 = vsel %vm554, %v1208, 0
      %v1303 = vsel %vm554, %v1209, 0
      %v1306 = vsel %vm554, %v1210, 0
      %1308 = vmatpush.msra.mxu0 0.0
      %1309 = vmatpush.msra.mxu0 0.0
      %1310 = vmatpush.msra.mxu0 0.0
      %1311 = vmatpush.msra.mxu0 0.0
      %1312 = vmatpush.msra.mxu0 0.0
      %1313 = vmatpush.msra.mxu0 0.0
      %1314 = vmatpush.msra.mxu0 0.0
      %1315 = vmatpush.msra.mxu0 0.0
      %1316 = vmatpush.msra.mxu0 0.0
      %1317 = vmatpush.msra.mxu0 0.0
      %1318 = vmatpush.msra.mxu0 0.0
      %1319 = vmatpush.msra.mxu0 0.0
      %1320 = vmatpush.msra.mxu0 %v273
      %1321 = vmatpush.msra.mxu0 %v272
      %1322 = vmatpush.msra.mxu0 %v271
      %1323 = vmatpush.msra.mxu0 %v270
      %1324 = vmatmul.f32.gmra.mxu0 %v1213
      %v1325 = vpop.f32.mrf.mxu0
      %v1326 = vadd.f32 %v1211, %v1325
      %1327 = vmatmul.f32.gmra.mxu0 %v1216
      %v1328 = vpop.f32.mrf.mxu0
      %v1329 = vadd.f32 %v1211, %v1328
      %1330 = vmatmul.f32.gmra.mxu0 %v1219
      %v1331 = vpop.f32.mrf.mxu0
      %v1332 = vadd.f32 %v1211, %v1331
      %1333 = vmatmul.f32.gmra.mxu0 %v1222
      %v1334 = vpop.f32.mrf.mxu0
      %v1335 = vadd.f32 %v1211, %v1334
      %1336 = vmatmul.f32.gmra.mxu0 %v1225
      %v1337 = vpop.f32.mrf.mxu0
      %v1338 = vadd.f32 %v1211, %v1337
      %1339 = vmatmul.f32.gmra.mxu0 %v1228
      %v1340 = vpop.f32.mrf.mxu0
      %v1341 = vadd.f32 %v1211, %v1340
      %1342 = vmatmul.f32.gmra.mxu0 %v1231
      %v1343 = vpop.f32.mrf.mxu0
      %v1344 = vadd.f32 %v1211, %v1343
      %1345 = vmatmul.f32.gmra.mxu0 %v1234
      %v1346 = vpop.f32.mrf.mxu0
      %v1347 = vadd.f32 %v1211, %v1346
      %1348 = vmatmul.f32.gmra.mxu0 %v1237
      %v1349 = vpop.f32.mrf.mxu0
      %v1350 = vadd.f32 %v1211, %v1349
      %1351 = vmatmul.f32.gmra.mxu0 %v1240
      %v1352 = vpop.f32.mrf.mxu0
      %v1353 = vadd.f32 %v1211, %v1352
      %1354 = vmatmul.f32.gmra.mxu0 %v1243
      %v1355 = vpop.f32.mrf.mxu0
      %v1356 = vadd.f32 %v1211, %v1355
      %1357 = vmatmul.f32.gmra.mxu0 %v1246
      %v1358 = vpop.f32.mrf.mxu0
      %v1359 = vadd.f32 %v1211, %v1358
      %1360 = vmatmul.f32.gmra.mxu0 %v1249
      %v1361 = vpop.f32.mrf.mxu0
      %v1362 = vadd.f32 %v1211, %v1361
      %1363 = vmatmul.f32.gmra.mxu0 %v1252
      %v1364 = vpop.f32.mrf.mxu0
      %v1365 = vadd.f32 %v1211, %v1364
      %1366 = vmatmul.f32.gmra.mxu0 %v1255
      %v1367 = vpop.f32.mrf.mxu0
      %v1368 = vadd.f32 %v1211, %v1367
      %1369 = vmatmul.f32.gmra.mxu0 %v1258
      %v1370 = vpop.f32.mrf.mxu0
      %v1371 = vadd.f32 %v1211, %v1370
      %1372 = vmatmul.f32.gmra.mxu0 %v1261
      %v1373 = vpop.f32.mrf.mxu0
      %v1374 = vadd.f32 %v1211, %v1373
      %1375 = vmatmul.f32.gmra.mxu0 %v1264
      %v1376 = vpop.f32.mrf.mxu0
      %v1377 = vadd.f32 %v1211, %v1376
      %1378 = vmatmul.f32.gmra.mxu0 %v1267
      %v1379 = vpop.f32.mrf.mxu0
      %v1380 = vadd.f32 %v1211, %v1379
      %1381 = vmatmul.f32.gmra.mxu0 %v1270
      %v1382 = vpop.f32.mrf.mxu0
      %v1383 = vadd.f32 %v1211, %v1382
      %1384 = vmatmul.f32.gmra.mxu0 %v1273
      %v1385 = vpop.f32.mrf.mxu0
      %v1386 = vadd.f32 %v1211, %v1385
      %1387 = vmatmul.f32.gmra.mxu0 %v1276
      %v1388 = vpop.f32.mrf.mxu0
      %v1389 = vadd.f32 %v1211, %v1388
      %1390 = vmatmul.f32.gmra.mxu0 %v1279
      %v1391 = vpop.f32.mrf.mxu0
      %v1392 = vadd.f32 %v1211, %v1391
      %1393 = vmatmul.f32.gmra.mxu0 %v1282
      %v1394 = vpop.f32.mrf.mxu0
      %v1395 = vadd.f32 %v1211, %v1394
      %1396 = vmatmul.f32.gmra.mxu0 %v1285
      %v1397 = vpop.f32.mrf.mxu0
      %v1398 = vadd.f32 %v1211, %v1397
      %1399 = vmatmul.f32.gmra.mxu0 %v1288
      %v1400 = vpop.f32.mrf.mxu0
      %v1401 = vadd.f32 %v1211, %v1400
      %1402 = vmatmul.f32.gmra.mxu0 %v1291
      %v1403 = vpop.f32.mrf.mxu0
      %v1404 = vadd.f32 %v1211, %v1403
      %1405 = vmatmul.f32.gmra.mxu0 %v1294
      %v1406 = vpop.f32.mrf.mxu0
      %v1407 = vadd.f32 %v1211, %v1406
      %1408 = vmatmul.f32.gmra.mxu0 %v1297
      %v1409 = vpop.f32.mrf.mxu0
      %v1410 = vadd.f32 %v1211, %v1409
      %1411 = vmatmul.f32.gmra.mxu0 %v1300
      %v1412 = vpop.f32.mrf.mxu0
      %v1413 = vadd.f32 %v1211, %v1412
      %1414 = vmatmul.f32.gmra.mxu0 %v1303
      %v1415 = vpop.f32.mrf.mxu0
      %v1416 = vadd.f32 %v1211, %v1415
      %1417 = vmatmul.f32.gmra.mxu0 %v1306
      %v1418 = vpop.f32.mrf.mxu0
      %v1419 = vadd.f32 %v1211, %v1418
      %1420 = vdwg.mxu0
      %v1421 = vmax.f32 %v1326, 0.0
      %v1422 = vmax.f32 %v1329, 0.0
      %v1423 = vmax.f32 %v1332, 0.0
      %v1424 = vmax.f32 %v1335, 0.0
      %v1425 = vmax.f32 %v1338, 0.0
      %v1426 = vmax.f32 %v1341, 0.0
      %v1427 = vmax.f32 %v1344, 0.0
      %v1428 = vmax.f32 %v1347, 0.0
      %v1429 = vmax.f32 %v1350, 0.0
      %v1430 = vmax.f32 %v1353, 0.0
      %v1431 = vmax.f32 %v1356, 0.0
      %v1432 = vmax.f32 %v1359, 0.0
      %v1433 = vmax.f32 %v1362, 0.0
      %v1434 = vmax.f32 %v1365, 0.0
      %v1435 = vmax.f32 %v1368, 0.0
      %v1436 = vmax.f32 %v1371, 0.0
      %v1437 = vmax.f32 %v1374, 0.0
      %v1438 = vmax.f32 %v1377, 0.0
      %v1439 = vmax.f32 %v1380, 0.0
      %v1440 = vmax.f32 %v1383, 0.0
      %v1441 = vmax.f32 %v1386, 0.0
      %v1442 = vmax.f32 %v1389, 0.0
      %v1443 = vmax.f32 %v1392, 0.0
      %v1444 = vmax.f32 %v1395, 0.0
      %v1445 = vmax.f32 %v1398, 0.0
      %v1446 = vmax.f32 %v1401, 0.0
      %v1447 = vmax.f32 %v1404, 0.0
      %v1448 = vmax.f32 %v1407, 0.0
      %v1449 = vmax.f32 %v1410, 0.0
      %v1450 = vmax.f32 %v1413, 0.0
      %v1451 = vmax.f32 %v1416, 0.0
      %v1452 = vmax.f32 %v1419, 0.0
      %v1453 = vld [vmem:[%s4] sm:$0xff]
      %v1454 = vld [vmem:[%s4 + $0x8] sm:$0xff]
      %v1455 = vld [vmem:[%s4 + $0x10] sm:$0xff]
      %v1456 = vld [vmem:[%s4 + $0x18] sm:$0xff]
      %v1458 = vsel %vm554, %v1421, 0
      %v1461 = vsel %vm554, %v1422, 0
      %v1464 = vsel %vm554, %v1423, 0
      %v1467 = vsel %vm554, %v1424, 0
      %v1470 = vsel %vm554, %v1425, 0
      %v1473 = vsel %vm554, %v1426, 0
      %v1476 = vsel %vm554, %v1427, 0
      %v1479 = vsel %vm554, %v1428, 0
      %v1482 = vsel %vm554, %v1429, 0
      %v1485 = vsel %vm554, %v1430, 0
      %v1488 = vsel %vm554, %v1431, 0
      %v1491 = vsel %vm554, %v1432, 0
      %v1494 = vsel %vm554, %v1433, 0
      %v1497 = vsel %vm554, %v1434, 0
      %v1500 = vsel %vm554, %v1435, 0
      %v1503 = vsel %vm554, %v1436, 0
      %v1506 = vsel %vm554, %v1437, 0
      %v1509 = vsel %vm554, %v1438, 0
      %v1512 = vsel %vm554, %v1439, 0
      %v1515 = vsel %vm554, %v1440, 0
      %v1518 = vsel %vm554, %v1441, 0
      %v1521 = vsel %vm554, %v1442, 0
      %v1524 = vsel %vm554, %v1443, 0
      %v1527 = vsel %vm554, %v1444, 0
      %v1530 = vsel %vm554, %v1445, 0
      %v1533 = vsel %vm554, %v1446, 0
      %v1536 = vsel %vm554, %v1447, 0
      %v1539 = vsel %vm554, %v1448, 0
      %v1542 = vsel %vm554, %v1449, 0
      %v1545 = vsel %vm554, %v1450, 0
      %v1548 = vsel %vm554, %v1451, 0
      %v1551 = vsel %vm554, %v1452, 0
      %1553 = vmatpush.msra.mxu0 0.0
      %1554 = vmatpush.msra.mxu0 0.0
      %1555 = vmatpush.msra.mxu0 0.0
      %1556 = vmatpush.msra.mxu0 0.0
      %1557 = vmatpush.msra.mxu0 0.0
      %1558 = vmatpush.msra.mxu0 0.0
      %1559 = vmatpush.msra.mxu0 0.0
      %1560 = vmatpush.msra.mxu0 0.0
      %1561 = vmatpush.msra.mxu0 0.0
      %1562 = vmatpush.msra.mxu0 0.0
      %1563 = vmatpush.msra.mxu0 0.0
      %1564 = vmatpush.msra.mxu0 0.0
      %1565 = vmatpush.msra.mxu0 %v1456
      %1566 = vmatpush.msra.mxu0 %v1455
      %1567 = vmatpush.msra.mxu0 %v1454
      %1568 = vmatpush.msra.mxu0 %v1453
      %1569 = vmatmul.f32.gmra.mxu0 %v1458
      %v1570 = vpop.f32.mrf.mxu0
      %v1571 = vadd.f32 0.0, %v1570
      %1572 = vmatmul.f32.gmra.mxu0 %v1461
      %v1573 = vpop.f32.mrf.mxu0
      %v1574 = vadd.f32 0.0, %v1573
      %1575 = vmatmul.f32.gmra.mxu0 %v1464
      %v1576 = vpop.f32.mrf.mxu0
      %v1577 = vadd.f32 0.0, %v1576
      %1578 = vmatmul.f32.gmra.mxu0 %v1467
      %v1579 = vpop.f32.mrf.mxu0
      %v1580 = vadd.f32 0.0, %v1579
      %1581 = vmatmul.f32.gmra.mxu0 %v1470
      %v1582 = vpop.f32.mrf.mxu0
      %v1583 = vadd.f32 0.0, %v1582
      %1584 = vmatmul.f32.gmra.mxu0 %v1473
      %v1585 = vpop.f32.mrf.mxu0
      %v1586 = vadd.f32 0.0, %v1585
      %1587 = vmatmul.f32.gmra.mxu0 %v1476
      %v1588 = vpop.f32.mrf.mxu0
      %v1589 = vadd.f32 0.0, %v1588
      %1590 = vmatmul.f32.gmra.mxu0 %v1479
      %v1591 = vpop.f32.mrf.mxu0
      %v1592 = vadd.f32 0.0, %v1591
      %1593 = vmatmul.f32.gmra.mxu0 %v1482
      %v1594 = vpop.f32.mrf.mxu0
      %v1595 = vadd.f32 0.0, %v1594
      %1596 = vmatmul.f32.gmra.mxu0 %v1485
      %v1597 = vpop.f32.mrf.mxu0
      %v1598 = vadd.f32 0.0, %v1597
      %1599 = vmatmul.f32.gmra.mxu0 %v1488
      %v1600 = vpop.f32.mrf.mxu0
      %v1601 = vadd.f32 0.0, %v1600
      %1602 = vmatmul.f32.gmra.mxu0 %v1491
      %v1603 = vpop.f32.mrf.mxu0
      %v1604 = vadd.f32 0.0, %v1603
      %1605 = vmatmul.f32.gmra.mxu0 %v1494
      %v1606 = vpop.f32.mrf.mxu0
      %v1607 = vadd.f32 0.0, %v1606
      %1608 = vmatmul.f32.gmra.mxu0 %v1497
      %v1609 = vpop.f32.mrf.mxu0
      %v1610 = vadd.f32 0.0, %v1609
      %1611 = vmatmul.f32.gmra.mxu0 %v1500
      %v1612 = vpop.f32.mrf.mxu0
      %v1613 = vadd.f32 0.0, %v1612
      %1614 = vmatmul.f32.gmra.mxu0 %v1503
      %v1615 = vpop.f32.mrf.mxu0
      %v1616 = vadd.f32 0.0, %v1615
      %1617 = vmatmul.f32.gmra.mxu0 %v1506
      %v1618 = vpop.f32.mrf.mxu0
      %v1619 = vadd.f32 0.0, %v1618
      %1620 = vmatmul.f32.gmra.mxu0 %v1509
      %v1621 = vpop.f32.mrf.mxu0
      %v1622 = vadd.f32 0.0, %v1621
      %1623 = vmatmul.f32.gmra.mxu0 %v1512
      %v1624 = vpop.f32.mrf.mxu0
      %v1625 = vadd.f32 0.0, %v1624
      %1626 = vmatmul.f32.gmra.mxu0 %v1515
      %v1627 = vpop.f32.mrf.mxu0
      %v1628 = vadd.f32 0.0, %v1627
      %1629 = vmatmul.f32.gmra.mxu0 %v1518
      %v1630 = vpop.f32.mrf.mxu0
      %v1631 = vadd.f32 0.0, %v1630
      %1632 = vmatmul.f32.gmra.mxu0 %v1521
      %v1633 = vpop.f32.mrf.mxu0
      %v1634 = vadd.f32 0.0, %v1633
      %1635 = vmatmul.f32.gmra.mxu0 %v1524
      %v1636 = vpop.f32.mrf.mxu0
      %v1637 = vadd.f32 0.0, %v1636
      %1638 = vmatmul.f32.gmra.mxu0 %v1527
      %v1639 = vpop.f32.mrf.mxu0
      %v1640 = vadd.f32 0.0, %v1639
      %1641 = vmatmul.f32.gmra.mxu0 %v1530
      %v1642 = vpop.f32.mrf.mxu0
      %v1643 = vadd.f32 0.0, %v1642
      %1644 = vmatmul.f32.gmra.mxu0 %v1533
      %v1645 = vpop.f32.mrf.mxu0
      %v1646 = vadd.f32 0.0, %v1645
      %1647 = vmatmul.f32.gmra.mxu0 %v1536
      %v1648 = vpop.f32.mrf.mxu0
      %v1649 = vadd.f32 0.0, %v1648
      %1650 = vmatmul.f32.gmra.mxu0 %v1539
      %v1651 = vpop.f32.mrf.mxu0
      %v1652 = vadd.f32 0.0, %v1651
      %1653 = vmatmul.f32.gmra.mxu0 %v1542
      %v1654 = vpop.f32.mrf.mxu0
      %v1655 = vadd.f32 0.0, %v1654
      %1656 = vmatmul.f32.gmra.mxu0 %v1545
      %v1657 = vpop.f32.mrf.mxu0
      %v1658 = vadd.f32 0.0, %v1657
      %1659 = vmatmul.f32.gmra.mxu0 %v1548
      %v1660 = vpop.f32.mrf.mxu0
      %v1661 = vadd.f32 0.0, %v1660
      %1662 = vmatmul.f32.gmra.mxu0 %v1551
      %v1663 = vpop.f32.mrf.mxu0
      %v1664 = vadd.f32 0.0, %v1663
      %1665 = vdwg.mxu0
      %vm1666 = vcmask 7168
      %v1667 = vsel %vm1666, %v1571, -inf
      %v1668 = vrot.slane %v1667, 4
      %v1669 = vmax.f32 %v1667, %v1668
      %v1670 = vrot.slane %v1669, 2
      %v1671 = vmax.f32 %v1669, %v1670
      %v1672 = vrot.slane %v1671, 1
      %v1673 = vmax.f32 %v1671, %v1672
      %v1674 = vsel %vm1666, %v1574, -inf
      %v1675 = vrot.slane %v1674, 4
      %v1676 = vmax.f32 %v1674, %v1675
      %v1677 = vrot.slane %v1676, 2
      %v1678 = vmax.f32 %v1676, %v1677
      %v1679 = vrot.slane %v1678, 1
      %v1680 = vmax.f32 %v1678, %v1679
      %v1681 = vsel %vm1666, %v1577, -inf
      %v1682 = vrot.slane %v1681, 4
      %v1683 = vmax.f32 %v1681, %v1682
      %v1684 = vrot.slane %v1683, 2
      %v1685 = vmax.f32 %v1683, %v1684
      %v1686 = vrot.slane %v1685, 1
      %v1687 = vmax.f32 %v1685, %v1686
      %v1688 = vsel %vm1666, %v1580, -inf
      %v1689 = vrot.slane %v1688, 4
      %v1690 = vmax.f32 %v1688, %v1689
      %v1691 = vrot.slane %v1690, 2
      %v1692 = vmax.f32 %v1690, %v1691
      %v1693 = vrot.slane %v1692, 1
      %v1694 = vmax.f32 %v1692, %v1693
      %v1695 = vsel %vm1666, %v1583, -inf
      %v1696 = vrot.slane %v1695, 4
      %v1697 = vmax.f32 %v1695, %v1696
      %v1698 = vrot.slane %v1697, 2
      %v1699 = vmax.f32 %v1697, %v1698
      %v1700 = vrot.slane %v1699, 1
      %v1701 = vmax.f32 %v1699, %v1700
      %v1702 = vsel %vm1666, %v1586, -inf
      %v1703 = vrot.slane %v1702, 4
      %v1704 = vmax.f32 %v1702, %v1703
      %v1705 = vrot.slane %v1704, 2
      %v1706 = vmax.f32 %v1704, %v1705
      %v1707 = vrot.slane %v1706, 1
      %v1708 = vmax.f32 %v1706, %v1707
      %v1709 = vsel %vm1666, %v1589, -inf
      %v1710 = vrot.slane %v1709, 4
      %v1711 = vmax.f32 %v1709, %v1710
      %v1712 = vrot.slane %v1711, 2
      %v1713 = vmax.f32 %v1711, %v1712
      %v1714 = vrot.slane %v1713, 1
      %v1715 = vmax.f32 %v1713, %v1714
      %v1716 = vsel %vm1666, %v1592, -inf
      %v1717 = vrot.slane %v1716, 4
      %v1718 = vmax.f32 %v1716, %v1717
      %v1719 = vrot.slane %v1718, 2
      %v1720 = vmax.f32 %v1718, %v1719
      %v1721 = vrot.slane %v1720, 1
      %v1722 = vmax.f32 %v1720, %v1721
      %v1723 = vsel %vm1666, %v1595, -inf
      %v1724 = vrot.slane %v1723, 4
      %v1725 = vmax.f32 %v1723, %v1724
      %v1726 = vrot.slane %v1725, 2
      %v1727 = vmax.f32 %v1725, %v1726
      %v1728 = vrot.slane %v1727, 1
      %v1729 = vmax.f32 %v1727, %v1728
      %v1730 = vsel %vm1666, %v1598, -inf
      %v1731 = vrot.slane %v1730, 4
      %v1732 = vmax.f32 %v1730, %v1731
      %v1733 = vrot.slane %v1732, 2
      %v1734 = vmax.f32 %v1732, %v1733
      %v1735 = vrot.slane %v1734, 1
      %v1736 = vmax.f32 %v1734, %v1735
      %v1737 = vsel %vm1666, %v1601, -inf
      %v1738 = vrot.slane %v1737, 4
      %v1739 = vmax.f32 %v1737, %v1738
      %v1740 = vrot.slane %v1739, 2
      %v1741 = vmax.f32 %v1739, %v1740
      %v1742 = vrot.slane %v1741, 1
      %v1743 = vmax.f32 %v1741, %v1742
      %v1744 = vsel %vm1666, %v1604, -inf
      %v1745 = vrot.slane %v1744, 4
      %v1746 = vmax.f32 %v1744, %v1745
      %v1747 = vrot.slane %v1746, 2
      %v1748 = vmax.f32 %v1746, %v1747
      %v1749 = vrot.slane %v1748, 1
      %v1750 = vmax.f32 %v1748, %v1749
      %v1751 = vsel %vm1666, %v1607, -inf
      %v1752 = vrot.slane %v1751, 4
      %v1753 = vmax.f32 %v1751, %v1752
      %v1754 = vrot.slane %v1753, 2
      %v1755 = vmax.f32 %v1753, %v1754
      %v1756 = vrot.slane %v1755, 1
      %v1757 = vmax.f32 %v1755, %v1756
      %v1758 = vsel %vm1666, %v1610, -inf
      %v1759 = vrot.slane %v1758, 4
      %v1760 = vmax.f32 %v1758, %v1759
      %v1761 = vrot.slane %v1760, 2
      %v1762 = vmax.f32 %v1760, %v1761
      %v1763 = vrot.slane %v1762, 1
      %v1764 = vmax.f32 %v1762, %v1763
      %v1765 = vsel %vm1666, %v1613, -inf
      %v1766 = vrot.slane %v1765, 4
      %v1767 = vmax.f32 %v1765, %v1766
      %v1768 = vrot.slane %v1767, 2
      %v1769 = vmax.f32 %v1767, %v1768
      %v1770 = vrot.slane %v1769, 1
      %v1771 = vmax.f32 %v1769, %v1770
      %v1772 = vsel %vm1666, %v1616, -inf
      %v1773 = vrot.slane %v1772, 4
      %v1774 = vmax.f32 %v1772, %v1773
      %v1775 = vrot.slane %v1774, 2
      %v1776 = vmax.f32 %v1774, %v1775
      %v1777 = vrot.slane %v1776, 1
      %v1778 = vmax.f32 %v1776, %v1777
      %v1779 = vsel %vm1666, %v1619, -inf
      %v1780 = vrot.slane %v1779, 4
      %v1781 = vmax.f32 %v1779, %v1780
      %v1782 = vrot.slane %v1781, 2
      %v1783 = vmax.f32 %v1781, %v1782
      %v1784 = vrot.slane %v1783, 1
      %v1785 = vmax.f32 %v1783, %v1784
      %v1786 = vsel %vm1666, %v1622, -inf
      %v1787 = vrot.slane %v1786, 4
      %v1788 = vmax.f32 %v1786, %v1787
      %v1789 = vrot.slane %v1788, 2
      %v1790 = vmax.f32 %v1788, %v1789
      %v1791 = vrot.slane %v1790, 1
      %v1792 = vmax.f32 %v1790, %v1791
      %v1793 = vsel %vm1666, %v1625, -inf
      %v1794 = vrot.slane %v1793, 4
      %v1795 = vmax.f32 %v1793, %v1794
      %v1796 = vrot.slane %v1795, 2
      %v1797 = vmax.f32 %v1795, %v1796
      %v1798 = vrot.slane %v1797, 1
      %v1799 = vmax.f32 %v1797, %v1798
      %v1800 = vsel %vm1666, %v1628, -inf
      %v1801 = vrot.slane %v1800, 4
      %v1802 = vmax.f32 %v1800, %v1801
      %v1803 = vrot.slane %v1802, 2
      %v1804 = vmax.f32 %v1802, %v1803
      %v1805 = vrot.slane %v1804, 1
      %v1806 = vmax.f32 %v1804, %v1805
      %v1807 = vsel %vm1666, %v1631, -inf
      %v1808 = vrot.slane %v1807, 4
      %v1809 = vmax.f32 %v1807, %v1808
      %v1810 = vrot.slane %v1809, 2
      %v1811 = vmax.f32 %v1809, %v1810
      %v1812 = vrot.slane %v1811, 1
      %v1813 = vmax.f32 %v1811, %v1812
      %v1814 = vsel %vm1666, %v1634, -inf
      %v1815 = vrot.slane %v1814, 4
      %v1816 = vmax.f32 %v1814, %v1815
      %v1817 = vrot.slane %v1816, 2
      %v1818 = vmax.f32 %v1816, %v1817
      %v1819 = vrot.slane %v1818, 1
      %v1820 = vmax.f32 %v1818, %v1819
      %v1821 = vsel %vm1666, %v1637, -inf
      %v1822 = vrot.slane %v1821, 4
      %v1823 = vmax.f32 %v1821, %v1822
      %v1824 = vrot.slane %v1823, 2
      %v1825 = vmax.f32 %v1823, %v1824
      %v1826 = vrot.slane %v1825, 1
      %v1827 = vmax.f32 %v1825, %v1826
      %v1828 = vsel %vm1666, %v1640, -inf
      %v1829 = vrot.slane %v1828, 4
      %v1830 = vmax.f32 %v1828, %v1829
      %v1831 = vrot.slane %v1830, 2
      %v1832 = vmax.f32 %v1830, %v1831
      %v1833 = vrot.slane %v1832, 1
      %v1834 = vmax.f32 %v1832, %v1833
      %v1835 = vsel %vm1666, %v1643, -inf
      %v1836 = vrot.slane %v1835, 4
      %v1837 = vmax.f32 %v1835, %v1836
      %v1838 = vrot.slane %v1837, 2
      %v1839 = vmax.f32 %v1837, %v1838
      %v1840 = vrot.slane %v1839, 1
      %v1841 = vmax.f32 %v1839, %v1840
      %v1842 = vsel %vm1666, %v1646, -inf
      %v1843 = vrot.slane %v1842, 4
      %v1844 = vmax.f32 %v1842, %v1843
      %v1845 = vrot.slane %v1844, 2
      %v1846 = vmax.f32 %v1844, %v1845
      %v1847 = vrot.slane %v1846, 1
      %v1848 = vmax.f32 %v1846, %v1847
      %v1849 = vsel %vm1666, %v1649, -inf
      %v1850 = vrot.slane %v1849, 4
      %v1851 = vmax.f32 %v1849, %v1850
      %v1852 = vrot.slane %v1851, 2
      %v1853 = vmax.f32 %v1851, %v1852
      %v1854 = vrot.slane %v1853, 1
      %v1855 = vmax.f32 %v1853, %v1854
      %v1856 = vsel %vm1666, %v1652, -inf
      %v1857 = vrot.slane %v1856, 4
      %v1858 = vmax.f32 %v1856, %v1857
      %v1859 = vrot.slane %v1858, 2
      %v1860 = vmax.f32 %v1858, %v1859
      %v1861 = vrot.slane %v1860, 1
      %v1862 = vmax.f32 %v1860, %v1861
      %v1863 = vsel %vm1666, %v1655, -inf
      %v1864 = vrot.slane %v1863, 4
      %v1865 = vmax.f32 %v1863, %v1864
      %v1866 = vrot.slane %v1865, 2
      %v1867 = vmax.f32 %v1865, %v1866
      %v1868 = vrot.slane %v1867, 1
      %v1869 = vmax.f32 %v1867, %v1868
      %v1870 = vsel %vm1666, %v1658, -inf
      %v1871 = vrot.slane %v1870, 4
      %v1872 = vmax.f32 %v1870, %v1871
      %v1873 = vrot.slane %v1872, 2
      %v1874 = vmax.f32 %v1872, %v1873
      %v1875 = vrot.slane %v1874, 1
      %v1876 = vmax.f32 %v1874, %v1875
      %v1877 = vsel %vm1666, %v1661, -inf
      %v1878 = vrot.slane %v1877, 4
      %v1879 = vmax.f32 %v1877, %v1878
      %v1880 = vrot.slane %v1879, 2
      %v1881 = vmax.f32 %v1879, %v1880
      %v1882 = vrot.slane %v1881, 1
      %v1883 = vmax.f32 %v1881, %v1882
      %v1884 = vsel %vm1666, %v1664, -inf
      %v1885 = vrot.slane %v1884, 4
      %v1886 = vmax.f32 %v1884, %v1885
      %v1887 = vrot.slane %v1886, 2
      %v1888 = vmax.f32 %v1886, %v1887
      %v1889 = vrot.slane %v1888, 1
      %v1890 = vmax.f32 %v1888, %v1889
      %v1891 = vsub.f32 %v1571, %v1673
      %v1892 = vsub.f32 %v1574, %v1680
      %v1893 = vsub.f32 %v1577, %v1687
      %v1894 = vsub.f32 %v1580, %v1694
      %v1895 = vsub.f32 %v1583, %v1701
      %v1896 = vsub.f32 %v1586, %v1708
      %v1897 = vsub.f32 %v1589, %v1715
      %v1898 = vsub.f32 %v1592, %v1722
      %v1899 = vsub.f32 %v1595, %v1729
      %v1900 = vsub.f32 %v1598, %v1736
      %v1901 = vsub.f32 %v1601, %v1743
      %v1902 = vsub.f32 %v1604, %v1750
      %v1903 = vsub.f32 %v1607, %v1757
      %v1904 = vsub.f32 %v1610, %v1764
      %v1905 = vsub.f32 %v1613, %v1771
      %v1906 = vsub.f32 %v1616, %v1778
      %v1907 = vsub.f32 %v1619, %v1785
      %v1908 = vsub.f32 %v1622, %v1792
      %v1909 = vsub.f32 %v1625, %v1799
      %v1910 = vsub.f32 %v1628, %v1806
      %v1911 = vsub.f32 %v1631, %v1813
      %v1912 = vsub.f32 %v1634, %v1820
      %v1913 = vsub.f32 %v1637, %v1827
      %v1914 = vsub.f32 %v1640, %v1834
      %v1915 = vsub.f32 %v1643, %v1841
      %v1916 = vsub.f32 %v1646, %v1848
      %v1917 = vsub.f32 %v1649, %v1855
      %v1918 = vsub.f32 %v1652, %v1862
      %v1919 = vsub.f32 %v1655, %v1869
      %v1920 = vsub.f32 %v1658, %v1876
      %v1921 = vsub.f32 %v1661, %v1883
      %v1922 = vsub.f32 %v1664, %v1890
      %v1923 = vmul.f32 %v1891, 1.442695
      %v1924 = vpow.pop %v1923
      %v1925 = vmul.f32 %v1892, 1.442695
      %v1926 = vpow.pop %v1925
      %v1927 = vmul.f32 %v1893, 1.442695
      %v1928 = vpow.pop %v1927
      %v1929 = vmul.f32 %v1894, 1.442695
      %v1930 = vpow.pop %v1929
      %v1931 = vmul.f32 %v1895, 1.442695
      %v1932 = vpow.pop %v1931
      %v1933 = vmul.f32 %v1896, 1.442695
      %v1934 = vpow.pop %v1933
      %v1935 = vmul.f32 %v1897, 1.442695
      %v1936 = vpow.pop %v1935
      %v1937 = vmul.f32 %v1898, 1.442695
      %v1938 = vpow.pop %v1937
      %v1939 = vmul.f32 %v1899, 1.442695
      %v1940 = vpow.pop %v1939
      %v1941 = vmul.f32 %v1900, 1.442695
      %v1942 = vpow.pop %v1941
      %v1943 = vmul.f32 %v1901, 1.442695
      %v1944 = vpow.pop %v1943
      %v1945 = vmul.f32 %v1902, 1.442695
      %v1946 = vpow.pop %v1945
      %v1947 = vmul.f32 %v1903, 1.442695
      %v1948 = vpow.pop %v1947
      %v1949 = vmul.f32 %v1904, 1.442695
      %v1950 = vpow.pop %v1949
      %v1951 = vmul.f32 %v1905, 1.442695
      %v1952 = vpow.pop %v1951
      %v1953 = vmul.f32 %v1906, 1.442695
      %v1954 = vpow.pop %v1953
      %v1955 = vmul.f32 %v1907, 1.442695
      %v1956 = vpow.pop %v1955
      %v1957 = vmul.f32 %v1908, 1.442695
      %v1958 = vpow.pop %v1957
      %v1959 = vmul.f32 %v1909, 1.442695
      %v1960 = vpow.pop %v1959
      %v1961 = vmul.f32 %v1910, 1.442695
      %v1962 = vpow.pop %v1961
      %v1963 = vmul.f32 %v1911, 1.442695
      %v1964 = vpow.pop %v1963
      %v1965 = vmul.f32 %v1912, 1.442695
      %v1966 = vpow.pop %v1965
      %v1967 = vmul.f32 %v1913, 1.442695
      %v1968 = vpow.pop %v1967
      %v1969 = vmul.f32 %v1914, 1.442695
      %v1970 = vpow.pop %v1969
      %v1971 = vmul.f32 %v1915, 1.442695
      %v1972 = vpow.pop %v1971
      %v1973 = vmul.f32 %v1916, 1.442695
      %v1974 = vpow.pop %v1973
      %v1975 = vmul.f32 %v1917, 1.442695
      %v1976 = vpow.pop %v1975
      %v1977 = vmul.f32 %v1918, 1.442695
      %v1978 = vpow.pop %v1977
      %v1979 = vmul.f32 %v1919, 1.442695
      %v1980 = vpow.pop %v1979
      %v1981 = vmul.f32 %v1920, 1.442695
      %v1982 = vpow.pop %v1981
      %v1983 = vmul.f32 %v1921, 1.442695
      %v1984 = vpow.pop %v1983
      %v1985 = vmul.f32 %v1922, 1.442695
      %v1986 = vpow.pop %v1985
      %v1987 = vsel %vm1666, %v1924, 0.0
      %v1988 = vrot.slane %v1987, 4
      %v1989 = vadd.f32 %v1987, %v1988
      %v1990 = vrot.slane %v1989, 2
      %v1991 = vadd.f32 %v1989, %v1990
      %v1992 = vrot.slane %v1991, 1
      %v1993 = vadd.f32 %v1991, %v1992
      %v1994 = vsel %vm1666, %v1926, 0.0
      %v1995 = vrot.slane %v1994, 4
      %v1996 = vadd.f32 %v1994, %v1995
      %v1997 = vrot.slane %v1996, 2
      %v1998 = vadd.f32 %v1996, %v1997
      %v1999 = vrot.slane %v1998, 1
      %v2000 = vadd.f32 %v1998, %v1999
      %v2001 = vsel %vm1666, %v1928, 0.0
      %v2002 = vrot.slane %v2001, 4
      %v2003 = vadd.f32 %v2001, %v2002
      %v2004 = vrot.slane %v2003, 2
      %v2005 = vadd.f32 %v2003, %v2004
      %v2006 = vrot.slane %v2005, 1
      %v2007 = vadd.f32 %v2005, %v2006
      %v2008 = vsel %vm1666, %v1930, 0.0
      %v2009 = vrot.slane %v2008, 4
      %v2010 = vadd.f32 %v2008, %v2009
      %v2011 = vrot.slane %v2010, 2
      %v2012 = vadd.f32 %v2010, %v2011
      %v2013 = vrot.slane %v2012, 1
      %v2014 = vadd.f32 %v2012, %v2013
      %v2015 = vsel %vm1666, %v1932, 0.0
      %v2016 = vrot.slane %v2015, 4
      %v2017 = vadd.f32 %v2015, %v2016
      %v2018 = vrot.slane %v2017, 2
      %v2019 = vadd.f32 %v2017, %v2018
      %v2020 = vrot.slane %v2019, 1
      %v2021 = vadd.f32 %v2019, %v2020
      %v2022 = vsel %vm1666, %v1934, 0.0
      %v2023 = vrot.slane %v2022, 4
      %v2024 = vadd.f32 %v2022, %v2023
      %v2025 = vrot.slane %v2024, 2
      %v2026 = vadd.f32 %v2024, %v2025
      %v2027 = vrot.slane %v2026, 1
      %v2028 = vadd.f32 %v2026, %v2027
      %v2029 = vsel %vm1666, %v1936, 0.0
      %v2030 = vrot.slane %v2029, 4
      %v2031 = vadd.f32 %v2029, %v2030
      %v2032 = vrot.slane %v2031, 2
      %v2033 = vadd.f32 %v2031, %v2032
      %v2034 = vrot.slane %v2033, 1
      %v2035 = vadd.f32 %v2033, %v2034
      %v2036 = vsel %vm1666, %v1938, 0.0
      %v2037 = vrot.slane %v2036, 4
      %v2038 = vadd.f32 %v2036, %v2037
      %v2039 = vrot.slane %v2038, 2
      %v2040 = vadd.f32 %v2038, %v2039
      %v2041 = vrot.slane %v2040, 1
      %v2042 = vadd.f32 %v2040, %v2041
      %v2043 = vsel %vm1666, %v1940, 0.0
      %v2044 = vrot.slane %v2043, 4
      %v2045 = vadd.f32 %v2043, %v2044
      %v2046 = vrot.slane %v2045, 2
      %v2047 = vadd.f32 %v2045, %v2046
      %v2048 = vrot.slane %v2047, 1
      %v2049 = vadd.f32 %v2047, %v2048
      %v2050 = vsel %vm1666, %v1942, 0.0
      %v2051 = vrot.slane %v2050, 4
      %v2052 = vadd.f32 %v2050, %v2051
      %v2053 = vrot.slane %v2052, 2
      %v2054 = vadd.f32 %v2052, %v2053
      %v2055 = vrot.slane %v2054, 1
      %v2056 = vadd.f32 %v2054, %v2055
      %v2057 = vsel %vm1666, %v1944, 0.0
      %v2058 = vrot.slane %v2057, 4
      %v2059 = vadd.f32 %v2057, %v2058
      %v2060 = vrot.slane %v2059, 2
      %v2061 = vadd.f32 %v2059, %v2060
      %v2062 = vrot.slane %v2061, 1
      %v2063 = vadd.f32 %v2061, %v2062
      %v2064 = vsel %vm1666, %v1946, 0.0
      %v2065 = vrot.slane %v2064, 4
      %v2066 = vadd.f32 %v2064, %v2065
      %v2067 = vrot.slane %v2066, 2
      %v2068 = vadd.f32 %v2066, %v2067
      %v2069 = vrot.slane %v2068, 1
      %v2070 = vadd.f32 %v2068, %v2069
      %v2071 = vsel %vm1666, %v1948, 0.0
      %v2072 = vrot.slane %v2071, 4
      %v2073 = vadd.f32 %v2071, %v2072
      %v2074 = vrot.slane %v2073, 2
      %v2075 = vadd.f32 %v2073, %v2074
      %v2076 = vrot.slane %v2075, 1
      %v2077 = vadd.f32 %v2075, %v2076
      %v2078 = vsel %vm1666, %v1950, 0.0
      %v2079 = vrot.slane %v2078, 4
      %v2080 = vadd.f32 %v2078, %v2079
      %v2081 = vrot.slane %v2080, 2
      %v2082 = vadd.f32 %v2080, %v2081
      %v2083 = vrot.slane %v2082, 1
      %v2084 = vadd.f32 %v2082, %v2083
      %v2085 = vsel %vm1666, %v1952, 0.0
      %v2086 = vrot.slane %v2085, 4
      %v2087 = vadd.f32 %v2085, %v2086
      %v2088 = vrot.slane %v2087, 2
      %v2089 = vadd.f32 %v2087, %v2088
      %v2090 = vrot.slane %v2089, 1
      %v2091 = vadd.f32 %v2089, %v2090
      %v2092 = vsel %vm1666, %v1954, 0.0
      %v2093 = vrot.slane %v2092, 4
      %v2094 = vadd.f32 %v2092, %v2093
      %v2095 = vrot.slane %v2094, 2
      %v2096 = vadd.f32 %v2094, %v2095
      %v2097 = vrot.slane %v2096, 1
      %v2098 = vadd.f32 %v2096, %v2097
      %v2099 = vsel %vm1666, %v1956, 0.0
      %v2100 = vrot.slane %v2099, 4
      %v2101 = vadd.f32 %v2099, %v2100
      %v2102 = vrot.slane %v2101, 2
      %v2103 = vadd.f32 %v2101, %v2102
      %v2104 = vrot.slane %v2103, 1
      %v2105 = vadd.f32 %v2103, %v2104
      %v2106 = vsel %vm1666, %v1958, 0.0
      %v2107 = vrot.slane %v2106, 4
      %v2108 = vadd.f32 %v2106, %v2107
      %v2109 = vrot.slane %v2108, 2
      %v2110 = vadd.f32 %v2108, %v2109
      %v2111 = vrot.slane %v2110, 1
      %v2112 = vadd.f32 %v2110, %v2111
      %v2113 = vsel %vm1666, %v1960, 0.0
      %v2114 = vrot.slane %v2113, 4
      %v2115 = vadd.f32 %v2113, %v2114
      %v2116 = vrot.slane %v2115, 2
      %v2117 = vadd.f32 %v2115, %v2116
      %v2118 = vrot.slane %v2117, 1
      %v2119 = vadd.f32 %v2117, %v2118
      %v2120 = vsel %vm1666, %v1962, 0.0
      %v2121 = vrot.slane %v2120, 4
      %v2122 = vadd.f32 %v2120, %v2121
      %v2123 = vrot.slane %v2122, 2
      %v2124 = vadd.f32 %v2122, %v2123
      %v2125 = vrot.slane %v2124, 1
      %v2126 = vadd.f32 %v2124, %v2125
      %v2127 = vsel %vm1666, %v1964, 0.0
      %v2128 = vrot.slane %v2127, 4
      %v2129 = vadd.f32 %v2127, %v2128
      %v2130 = vrot.slane %v2129, 2
      %v2131 = vadd.f32 %v2129, %v2130
      %v2132 = vrot.slane %v2131, 1
      %v2133 = vadd.f32 %v2131, %v2132
      %v2134 = vsel %vm1666, %v1966, 0.0
      %v2135 = vrot.slane %v2134, 4
      %v2136 = vadd.f32 %v2134, %v2135
      %v2137 = vrot.slane %v2136, 2
      %v2138 = vadd.f32 %v2136, %v2137
      %v2139 = vrot.slane %v2138, 1
      %v2140 = vadd.f32 %v2138, %v2139
      %v2141 = vsel %vm1666, %v1968, 0.0
      %v2142 = vrot.slane %v2141, 4
      %v2143 = vadd.f32 %v2141, %v2142
      %v2144 = vrot.slane %v2143, 2
      %v2145 = vadd.f32 %v2143, %v2144
      %v2146 = vrot.slane %v2145, 1
      %v2147 = vadd.f32 %v2145, %v2146
      %v2148 = vsel %vm1666, %v1970, 0.0
      %v2149 = vrot.slane %v2148, 4
      %v2150 = vadd.f32 %v2148, %v2149
      %v2151 = vrot.slane %v2150, 2
      %v2152 = vadd.f32 %v2150, %v2151
      %v2153 = vrot.slane %v2152, 1
      %v2154 = vadd.f32 %v2152, %v2153
      %v2155 = vsel %vm1666, %v1972, 0.0
      %v2156 = vrot.slane %v2155, 4
      %v2157 = vadd.f32 %v2155, %v2156
      %v2158 = vrot.slane %v2157, 2
      %v2159 = vadd.f32 %v2157, %v2158
      %v2160 = vrot.slane %v2159, 1
      %v2161 = vadd.f32 %v2159, %v2160
      %v2162 = vsel %vm1666, %v1974, 0.0
      %v2163 = vrot.slane %v2162, 4
      %v2164 = vadd.f32 %v2162, %v2163
      %v2165 = vrot.slane %v2164, 2
      %v2166 = vadd.f32 %v2164, %v2165
      %v2167 = vrot.slane %v2166, 1
      %v2168 = vadd.f32 %v2166, %v2167
      %v2169 = vsel %vm1666, %v1976, 0.0
      %v2170 = vrot.slane %v2169, 4
      %v2171 = vadd.f32 %v2169, %v2170
      %v2172 = vrot.slane %v2171, 2
      %v2173 = vadd.f32 %v2171, %v2172
      %v2174 = vrot.slane %v2173, 1
      %v2175 = vadd.f32 %v2173, %v2174
      %v2176 = vsel %vm1666, %v1978, 0.0
      %v2177 = vrot.slane %v2176, 4
      %v2178 = vadd.f32 %v2176, %v2177
      %v2179 = vrot.slane %v2178, 2
      %v2180 = vadd.f32 %v2178, %v2179
      %v2181 = vrot.slane %v2180, 1
      %v2182 = vadd.f32 %v2180, %v2181
      %v2183 = vsel %vm1666, %v1980, 0.0
      %v2184 = vrot.slane %v2183, 4
      %v2185 = vadd.f32 %v2183, %v2184
      %v2186 = vrot.slane %v2185, 2
      %v2187 = vadd.f32 %v2185, %v2186
      %v2188 = vrot.slane %v2187, 1
      %v2189 = vadd.f32 %v2187, %v2188
      %v2190 = vsel %vm1666, %v1982, 0.0
      %v2191 = vrot.slane %v2190, 4
      %v2192 = vadd.f32 %v2190, %v2191
      %v2193 = vrot.slane %v2192, 2
      %v2194 = vadd.f32 %v2192, %v2193
      %v2195 = vrot.slane %v2194, 1
      %v2196 = vadd.f32 %v2194, %v2195
      %v2197 = vsel %vm1666, %v1984, 0.0
      %v2198 = vrot.slane %v2197, 4
      %v2199 = vadd.f32 %v2197, %v2198
      %v2200 = vrot.slane %v2199, 2
      %v2201 = vadd.f32 %v2199, %v2200
      %v2202 = vrot.slane %v2201, 1
      %v2203 = vadd.f32 %v2201, %v2202
      %v2204 = vsel %vm1666, %v1986, 0.0
      %v2205 = vrot.slane %v2204, 4
      %v2206 = vadd.f32 %v2204, %v2205
      %v2207 = vrot.slane %v2206, 2
      %v2208 = vadd.f32 %v2206, %v2207
      %v2209 = vrot.slane %v2208, 1
      %v2210 = vadd.f32 %v2208, %v2209
      %v2211 = vrcp.pop %v1993
      %v2212 = vrcp.pop %v2000
      %v2213 = vrcp.pop %v2007
      %v2214 = vrcp.pop %v2014
      %v2215 = vrcp.pop %v2021
      %v2216 = vrcp.pop %v2028
      %v2217 = vrcp.pop %v2035
      %v2218 = vrcp.pop %v2042
      %v2219 = vrcp.pop %v2049
      %v2220 = vrcp.pop %v2056
      %v2221 = vrcp.pop %v2063
      %v2222 = vrcp.pop %v2070
      %v2223 = vrcp.pop %v2077
      %v2224 = vrcp.pop %v2084
      %v2225 = vrcp.pop %v2091
      %v2226 = vrcp.pop %v2098
      %v2227 = vrcp.pop %v2105
      %v2228 = vrcp.pop %v2112
      %v2229 = vrcp.pop %v2119
      %v2230 = vrcp.pop %v2126
      %v2231 = vrcp.pop %v2133
      %v2232 = vrcp.pop %v2140
      %v2233 = vrcp.pop %v2147
      %v2234 = vrcp.pop %v2154
      %v2235 = vrcp.pop %v2161
      %v2236 = vrcp.pop %v2168
      %v2237 = vrcp.pop %v2175
      %v2238 = vrcp.pop %v2182
      %v2239 = vrcp.pop %v2189
      %v2240 = vrcp.pop %v2196
      %v2241 = vrcp.pop %v2203
      %v2242 = vrcp.pop %v2210
      %v2243 = vmul.f32 %v1924, %v2211
      %v2244 = vmul.f32 %v1926, %v2212
      %v2245 = vmul.f32 %v1928, %v2213
      %v2246 = vmul.f32 %v1930, %v2214
      %v2247 = vmul.f32 %v1932, %v2215
      %v2248 = vmul.f32 %v1934, %v2216
      %v2249 = vmul.f32 %v1936, %v2217
      %v2250 = vmul.f32 %v1938, %v2218
      %v2251 = vmul.f32 %v1940, %v2219
      %v2252 = vmul.f32 %v1942, %v2220
      %v2253 = vmul.f32 %v1944, %v2221
      %v2254 = vmul.f32 %v1946, %v2222
      %v2255 = vmul.f32 %v1948, %v2223
      %v2256 = vmul.f32 %v1950, %v2224
      %v2257 = vmul.f32 %v1952, %v2225
      %v2258 = vmul.f32 %v1954, %v2226
      %v2259 = vmul.f32 %v1956, %v2227
      %v2260 = vmul.f32 %v1958, %v2228
      %v2261 = vmul.f32 %v1960, %v2229
      %v2262 = vmul.f32 %v1962, %v2230
      %v2263 = vmul.f32 %v1964, %v2231
      %v2264 = vmul.f32 %v1966, %v2232
      %v2265 = vmul.f32 %v1968, %v2233
      %v2266 = vmul.f32 %v1970, %v2234
      %v2267 = vmul.f32 %v1972, %v2235
      %v2268 = vmul.f32 %v1974, %v2236
      %v2269 = vmul.f32 %v1976, %v2237
      %v2270 = vmul.f32 %v1978, %v2238
      %v2271 = vmul.f32 %v1980, %v2239
      %v2272 = vmul.f32 %v1982, %v2240
      %v2273 = vmul.f32 %v1984, %v2241
      %v2274 = vmul.f32 %v1986, %v2242
      %2276 = vset.pattern.permute.xlu0 0
      %2277 = vperm.xlu0 %2276, %v2243
      %v2278 = vpop.permute.xlu0 %2277
      %2281 = vset.pattern.permute.xlu0 0
      %2282 = vperm.xlu0 %2281, %v2244
      %v2283 = vpop.permute.xlu0 %2282
      %2286 = vset.pattern.permute.xlu0 0
      %2287 = vperm.xlu0 %2286, %v2245
      %v2288 = vpop.permute.xlu0 %2287
      %2291 = vset.pattern.permute.xlu0 0
      %2292 = vperm.xlu0 %2291, %v2246
      %v2293 = vpop.permute.xlu0 %2292
      %2296 = vset.pattern.permute.xlu0 0
      %2297 = vperm.xlu0 %2296, %v2247
      %v2298 = vpop.permute.xlu0 %2297
      %2301 = vset.pattern.permute.xlu0 0
      %2302 = vperm.xlu0 %2301, %v2248
      %v2303 = vpop.permute.xlu0 %2302
      %2306 = vset.pattern.permute.xlu0 0
      %2307 = vperm.xlu0 %2306, %v2249
      %v2308 = vpop.permute.xlu0 %2307
      %2311 = vset.pattern.permute.xlu0 0
      %2312 = vperm.xlu0 %2311, %v2250
      %v2313 = vpop.permute.xlu0 %2312
      %2316 = vset.pattern.permute.xlu0 0
      %2317 = vperm.xlu0 %2316, %v2251
      %v2318 = vpop.permute.xlu0 %2317
      %2321 = vset.pattern.permute.xlu0 0
      %2322 = vperm.xlu0 %2321, %v2252
      %v2323 = vpop.permute.xlu0 %2322
      %2326 = vset.pattern.permute.xlu0 0
      %2327 = vperm.xlu0 %2326, %v2253
      %v2328 = vpop.permute.xlu0 %2327
      %2331 = vset.pattern.permute.xlu0 0
      %2332 = vperm.xlu0 %2331, %v2254
      %v2333 = vpop.permute.xlu0 %2332
      %2336 = vset.pattern.permute.xlu0 0
      %2337 = vperm.xlu0 %2336, %v2255
      %v2338 = vpop.permute.xlu0 %2337
      %2341 = vset.pattern.permute.xlu0 0
      %2342 = vperm.xlu0 %2341, %v2256
      %v2343 = vpop.permute.xlu0 %2342
      %2346 = vset.pattern.permute.xlu0 0
      %2347 = vperm.xlu0 %2346, %v2257
      %v2348 = vpop.permute.xlu0 %2347
      %2351 = vset.pattern.permute.xlu0 0
      %2352 = vperm.xlu0 %2351, %v2258
      %v2353 = vpop.permute.xlu0 %2352
      %2356 = vset.pattern.permute.xlu0 0
      %2357 = vperm.xlu0 %2356, %v2259
      %v2358 = vpop.permute.xlu0 %2357
      %2361 = vset.pattern.permute.xlu0 0
      %2362 = vperm.xlu0 %2361, %v2260
      %v2363 = vpop.permute.xlu0 %2362
      %2366 = vset.pattern.permute.xlu0 0
      %2367 = vperm.xlu0 %2366, %v2261
      %v2368 = vpop.permute.xlu0 %2367
      %2371 = vset.pattern.permute.xlu0 0
      %2372 = vperm.xlu0 %2371, %v2262
      %v2373 = vpop.permute.xlu0 %2372
      %2376 = vset.pattern.permute.xlu0 0
      %2377 = vperm.xlu0 %2376, %v2263
      %v2378 = vpop.permute.xlu0 %2377
      %2381 = vset.pattern.permute.xlu0 0
      %2382 = vperm.xlu0 %2381, %v2264
      %v2383 = vpop.permute.xlu0 %2382
      %2386 = vset.pattern.permute.xlu0 0
      %2387 = vperm.xlu0 %2386, %v2265
      %v2388 = vpop.permute.xlu0 %2387
      %2391 = vset.pattern.permute.xlu0 0
      %2392 = vperm.xlu0 %2391, %v2266
      %v2393 = vpop.permute.xlu0 %2392
      %2396 = vset.pattern.permute.xlu0 0
      %2397 = vperm.xlu0 %2396, %v2267
      %v2398 = vpop.permute.xlu0 %2397
      %2401 = vset.pattern.permute.xlu0 0
      %2402 = vperm.xlu0 %2401, %v2268
      %v2403 = vpop.permute.xlu0 %2402
      %2406 = vset.pattern.permute.xlu0 0
      %2407 = vperm.xlu0 %2406, %v2269
      %v2408 = vpop.permute.xlu0 %2407
      %2411 = vset.pattern.permute.xlu0 0
      %2412 = vperm.xlu0 %2411, %v2270
      %v2413 = vpop.permute.xlu0 %2412
      %2416 = vset.pattern.permute.xlu0 0
      %2417 = vperm.xlu0 %2416, %v2271
      %v2418 = vpop.permute.xlu0 %2417
      %2421 = vset.pattern.permute.xlu0 0
      %2422 = vperm.xlu0 %2421, %v2272
      %v2423 = vpop.permute.xlu0 %2422
      %2426 = vset.pattern.permute.xlu0 0
      %2427 = vperm.xlu0 %2426, %v2273
      %v2428 = vpop.permute.xlu0 %2427
      %2431 = vset.pattern.permute.xlu0 0
      %2432 = vperm.xlu0 %2431, %v2274
      %v2433 = vpop.permute.xlu0 %2432
      %v2435 = vmul.f32 %v2278, %v764
      %v2436 = vmul.f32 %v2283, %v765
      %v2437 = vmul.f32 %v2288, %v766
      %v2438 = vmul.f32 %v2293, %v767
      %v2439 = vmul.f32 %v2298, %v768
      %v2440 = vmul.f32 %v2303, %v769
      %v2441 = vmul.f32 %v2308, %v770
      %v2442 = vmul.f32 %v2313, %v771
      %v2443 = vmul.f32 %v2318, %v772
      %v2444 = vmul.f32 %v2323, %v773
      %v2445 = vmul.f32 %v2328, %v774
      %v2446 = vmul.f32 %v2333, %v775
      %v2447 = vmul.f32 %v2338, %v776
      %v2448 = vmul.f32 %v2343, %v777
      %v2449 = vmul.f32 %v2348, %v778
      %v2450 = vmul.f32 %v2353, %v779
      %v2451 = vmul.f32 %v2358, %v780
      %v2452 = vmul.f32 %v2363, %v781
      %v2453 = vmul.f32 %v2368, %v782
      %v2454 = vmul.f32 %v2373, %v783
      %v2455 = vmul.f32 %v2378, %v784
      %v2456 = vmul.f32 %v2383, %v785
      %v2457 = vmul.f32 %v2388, %v786
      %v2458 = vmul.f32 %v2393, %v787
      %v2459 = vmul.f32 %v2398, %v788
      %v2460 = vmul.f32 %v2403, %v789
      %v2461 = vmul.f32 %v2408, %v790
      %v2462 = vmul.f32 %v2413, %v791
      %v2463 = vmul.f32 %v2418, %v792
      %v2464 = vmul.f32 %v2423, %v793
      %v2465 = vmul.f32 %v2428, %v794
      %v2466 = vmul.f32 %v2433, %v795
      %v2467 = vsel %vm554, %v2435, 0.0
      %v2468 = vrot.slane %v2467, 4
      %v2469 = vadd.f32 %v2467, %v2468
      %v2470 = vrot.slane %v2469, 2
      %v2471 = vadd.f32 %v2469, %v2470
      %v2472 = vrot.slane %v2471, 1
      %v2473 = vadd.f32 %v2471, %v2472
      %v2474 = vsel %vm554, %v2436, 0.0
      %v2475 = vrot.slane %v2474, 4
      %v2476 = vadd.f32 %v2474, %v2475
      %v2477 = vrot.slane %v2476, 2
      %v2478 = vadd.f32 %v2476, %v2477
      %v2479 = vrot.slane %v2478, 1
      %v2480 = vadd.f32 %v2478, %v2479
      %v2481 = vsel %vm554, %v2437, 0.0
      %v2482 = vrot.slane %v2481, 4
      %v2483 = vadd.f32 %v2481, %v2482
      %v2484 = vrot.slane %v2483, 2
      %v2485 = vadd.f32 %v2483, %v2484
      %v2486 = vrot.slane %v2485, 1
      %v2487 = vadd.f32 %v2485, %v2486
      %v2488 = vsel %vm554, %v2438, 0.0
      %v2489 = vrot.slane %v2488, 4
      %v2490 = vadd.f32 %v2488, %v2489
      %v2491 = vrot.slane %v2490, 2
      %v2492 = vadd.f32 %v2490, %v2491
      %v2493 = vrot.slane %v2492, 1
      %v2494 = vadd.f32 %v2492, %v2493
      %v2495 = vsel %vm554, %v2439, 0.0
      %v2496 = vrot.slane %v2495, 4
      %v2497 = vadd.f32 %v2495, %v2496
      %v2498 = vrot.slane %v2497, 2
      %v2499 = vadd.f32 %v2497, %v2498
      %v2500 = vrot.slane %v2499, 1
      %v2501 = vadd.f32 %v2499, %v2500
      %v2502 = vsel %vm554, %v2440, 0.0
      %v2503 = vrot.slane %v2502, 4
      %v2504 = vadd.f32 %v2502, %v2503
      %v2505 = vrot.slane %v2504, 2
      %v2506 = vadd.f32 %v2504, %v2505
      %v2507 = vrot.slane %v2506, 1
      %v2508 = vadd.f32 %v2506, %v2507
      %v2509 = vsel %vm554, %v2441, 0.0
      %v2510 = vrot.slane %v2509, 4
      %v2511 = vadd.f32 %v2509, %v2510
      %v2512 = vrot.slane %v2511, 2
      %v2513 = vadd.f32 %v2511, %v2512
      %v2514 = vrot.slane %v2513, 1
      %v2515 = vadd.f32 %v2513, %v2514
      %v2516 = vsel %vm554, %v2442, 0.0
      %v2517 = vrot.slane %v2516, 4
      %v2518 = vadd.f32 %v2516, %v2517
      %v2519 = vrot.slane %v2518, 2
      %v2520 = vadd.f32 %v2518, %v2519
      %v2521 = vrot.slane %v2520, 1
      %v2522 = vadd.f32 %v2520, %v2521
      %v2523 = vsel %vm554, %v2443, 0.0
      %v2524 = vrot.slane %v2523, 4
      %v2525 = vadd.f32 %v2523, %v2524
      %v2526 = vrot.slane %v2525, 2
      %v2527 = vadd.f32 %v2525, %v2526
      %v2528 = vrot.slane %v2527, 1
      %v2529 = vadd.f32 %v2527, %v2528
      %v2530 = vsel %vm554, %v2444, 0.0
      %v2531 = vrot.slane %v2530, 4
      %v2532 = vadd.f32 %v2530, %v2531
      %v2533 = vrot.slane %v2532, 2
      %v2534 = vadd.f32 %v2532, %v2533
      %v2535 = vrot.slane %v2534, 1
      %v2536 = vadd.f32 %v2534, %v2535
      %v2537 = vsel %vm554, %v2445, 0.0
      %v2538 = vrot.slane %v2537, 4
      %v2539 = vadd.f32 %v2537, %v2538
      %v2540 = vrot.slane %v2539, 2
      %v2541 = vadd.f32 %v2539, %v2540
      %v2542 = vrot.slane %v2541, 1
      %v2543 = vadd.f32 %v2541, %v2542
      %v2544 = vsel %vm554, %v2446, 0.0
      %v2545 = vrot.slane %v2544, 4
      %v2546 = vadd.f32 %v2544, %v2545
      %v2547 = vrot.slane %v2546, 2
      %v2548 = vadd.f32 %v2546, %v2547
      %v2549 = vrot.slane %v2548, 1
      %v2550 = vadd.f32 %v2548, %v2549
      %v2551 = vsel %vm554, %v2447, 0.0
      %v2552 = vrot.slane %v2551, 4
      %v2553 = vadd.f32 %v2551, %v2552
      %v2554 = vrot.slane %v2553, 2
      %v2555 = vadd.f32 %v2553, %v2554
      %v2556 = vrot.slane %v2555, 1
      %v2557 = vadd.f32 %v2555, %v2556
      %v2558 = vsel %vm554, %v2448, 0.0
      %v2559 = vrot.slane %v2558, 4
      %v2560 = vadd.f32 %v2558, %v2559
      %v2561 = vrot.slane %v2560, 2
      %v2562 = vadd.f32 %v2560, %v2561
      %v2563 = vrot.slane %v2562, 1
      %v2564 = vadd.f32 %v2562, %v2563
      %v2565 = vsel %vm554, %v2449, 0.0
      %v2566 = vrot.slane %v2565, 4
      %v2567 = vadd.f32 %v2565, %v2566
      %v2568 = vrot.slane %v2567, 2
      %v2569 = vadd.f32 %v2567, %v2568
      %v2570 = vrot.slane %v2569, 1
      %v2571 = vadd.f32 %v2569, %v2570
      %v2572 = vsel %vm554, %v2450, 0.0
      %v2573 = vrot.slane %v2572, 4
      %v2574 = vadd.f32 %v2572, %v2573
      %v2575 = vrot.slane %v2574, 2
      %v2576 = vadd.f32 %v2574, %v2575
      %v2577 = vrot.slane %v2576, 1
      %v2578 = vadd.f32 %v2576, %v2577
      %v2579 = vsel %vm554, %v2451, 0.0
      %v2580 = vrot.slane %v2579, 4
      %v2581 = vadd.f32 %v2579, %v2580
      %v2582 = vrot.slane %v2581, 2
      %v2583 = vadd.f32 %v2581, %v2582
      %v2584 = vrot.slane %v2583, 1
      %v2585 = vadd.f32 %v2583, %v2584
      %v2586 = vsel %vm554, %v2452, 0.0
      %v2587 = vrot.slane %v2586, 4
      %v2588 = vadd.f32 %v2586, %v2587
      %v2589 = vrot.slane %v2588, 2
      %v2590 = vadd.f32 %v2588, %v2589
      %v2591 = vrot.slane %v2590, 1
      %v2592 = vadd.f32 %v2590, %v2591
      %v2593 = vsel %vm554, %v2453, 0.0
      %v2594 = vrot.slane %v2593, 4
      %v2595 = vadd.f32 %v2593, %v2594
      %v2596 = vrot.slane %v2595, 2
      %v2597 = vadd.f32 %v2595, %v2596
      %v2598 = vrot.slane %v2597, 1
      %v2599 = vadd.f32 %v2597, %v2598
      %v2600 = vsel %vm554, %v2454, 0.0
      %v2601 = vrot.slane %v2600, 4
      %v2602 = vadd.f32 %v2600, %v2601
      %v2603 = vrot.slane %v2602, 2
      %v2604 = vadd.f32 %v2602, %v2603
      %v2605 = vrot.slane %v2604, 1
      %v2606 = vadd.f32 %v2604, %v2605
      %v2607 = vsel %vm554, %v2455, 0.0
      %v2608 = vrot.slane %v2607, 4
      %v2609 = vadd.f32 %v2607, %v2608
      %v2610 = vrot.slane %v2609, 2
      %v2611 = vadd.f32 %v2609, %v2610
      %v2612 = vrot.slane %v2611, 1
      %v2613 = vadd.f32 %v2611, %v2612
      %v2614 = vsel %vm554, %v2456, 0.0
      %v2615 = vrot.slane %v2614, 4
      %v2616 = vadd.f32 %v2614, %v2615
      %v2617 = vrot.slane %v2616, 2
      %v2618 = vadd.f32 %v2616, %v2617
      %v2619 = vrot.slane %v2618, 1
      %v2620 = vadd.f32 %v2618, %v2619
      %v2621 = vsel %vm554, %v2457, 0.0
      %v2622 = vrot.slane %v2621, 4
      %v2623 = vadd.f32 %v2621, %v2622
      %v2624 = vrot.slane %v2623, 2
      %v2625 = vadd.f32 %v2623, %v2624
      %v2626 = vrot.slane %v2625, 1
      %v2627 = vadd.f32 %v2625, %v2626
      %v2628 = vsel %vm554, %v2458, 0.0
      %v2629 = vrot.slane %v2628, 4
      %v2630 = vadd.f32 %v2628, %v2629
      %v2631 = vrot.slane %v2630, 2
      %v2632 = vadd.f32 %v2630, %v2631
      %v2633 = vrot.slane %v2632, 1
      %v2634 = vadd.f32 %v2632, %v2633
      %v2635 = vsel %vm554, %v2459, 0.0
      %v2636 = vrot.slane %v2635, 4
      %v2637 = vadd.f32 %v2635, %v2636
      %v2638 = vrot.slane %v2637, 2
      %v2639 = vadd.f32 %v2637, %v2638
      %v2640 = vrot.slane %v2639, 1
      %v2641 = vadd.f32 %v2639, %v2640
      %v2642 = vsel %vm554, %v2460, 0.0
      %v2643 = vrot.slane %v2642, 4
      %v2644 = vadd.f32 %v2642, %v2643
      %v2645 = vrot.slane %v2644, 2
      %v2646 = vadd.f32 %v2644, %v2645
      %v2647 = vrot.slane %v2646, 1
      %v2648 = vadd.f32 %v2646, %v2647
      %v2649 = vsel %vm554, %v2461, 0.0
      %v2650 = vrot.slane %v2649, 4
      %v2651 = vadd.f32 %v2649, %v2650
      %v2652 = vrot.slane %v2651, 2
      %v2653 = vadd.f32 %v2651, %v2652
      %v2654 = vrot.slane %v2653, 1
      %v2655 = vadd.f32 %v2653, %v2654
      %v2656 = vsel %vm554, %v2462, 0.0
      %v2657 = vrot.slane %v2656, 4
      %v2658 = vadd.f32 %v2656, %v2657
      %v2659 = vrot.slane %v2658, 2
      %v2660 = vadd.f32 %v2658, %v2659
      %v2661 = vrot.slane %v2660, 1
      %v2662 = vadd.f32 %v2660, %v2661
      %v2663 = vsel %vm554, %v2463, 0.0
      %v2664 = vrot.slane %v2663, 4
      %v2665 = vadd.f32 %v2663, %v2664
      %v2666 = vrot.slane %v2665, 2
      %v2667 = vadd.f32 %v2665, %v2666
      %v2668 = vrot.slane %v2667, 1
      %v2669 = vadd.f32 %v2667, %v2668
      %v2670 = vsel %vm554, %v2464, 0.0
      %v2671 = vrot.slane %v2670, 4
      %v2672 = vadd.f32 %v2670, %v2671
      %v2673 = vrot.slane %v2672, 2
      %v2674 = vadd.f32 %v2672, %v2673
      %v2675 = vrot.slane %v2674, 1
      %v2676 = vadd.f32 %v2674, %v2675
      %v2677 = vsel %vm554, %v2465, 0.0
      %v2678 = vrot.slane %v2677, 4
      %v2679 = vadd.f32 %v2677, %v2678
      %v2680 = vrot.slane %v2679, 2
      %v2681 = vadd.f32 %v2679, %v2680
      %v2682 = vrot.slane %v2681, 1
      %v2683 = vadd.f32 %v2681, %v2682
      %v2684 = vsel %vm554, %v2466, 0.0
      %v2685 = vrot.slane %v2684, 4
      %v2686 = vadd.f32 %v2684, %v2685
      %v2687 = vrot.slane %v2686, 2
      %v2688 = vadd.f32 %v2686, %v2687
      %v2689 = vrot.slane %v2688, 1
      %v2690 = vadd.f32 %v2688, %v2689
      %vm2723 = vcmask 1041409
      %v2724 = vsel %vm2723, %v2480, %v2473
      %vm2725 = vcmask 1042434
      %v2726 = vsel %vm2725, %v2487, %v2724
      %vm2727 = vcmask 1043459
      %v2728 = vsel %vm2727, %v2494, %v2726
      %vm2729 = vcmask 1044484
      %v2730 = vsel %vm2729, %v2501, %v2728
      %vm2731 = vcmask 1045509
      %v2732 = vsel %vm2731, %v2508, %v2730
      %vm2733 = vcmask 1046534
      %v2734 = vsel %vm2733, %v2515, %v2732
      %vm2735 = vcmask 1047559
      %v2736 = vsel %vm2735, %v2522, %v2734
      %v2737 = vsel %vm2723, %v2536, %v2529
      %v2738 = vsel %vm2725, %v2543, %v2737
      %v2739 = vsel %vm2727, %v2550, %v2738
      %v2740 = vsel %vm2729, %v2557, %v2739
      %v2741 = vsel %vm2731, %v2564, %v2740
      %v2742 = vsel %vm2733, %v2571, %v2741
      %v2743 = vsel %vm2735, %v2578, %v2742
      %v2744 = vsel %vm2723, %v2592, %v2585
      %v2745 = vsel %vm2725, %v2599, %v2744
      %v2746 = vsel %vm2727, %v2606, %v2745
      %v2747 = vsel %vm2729, %v2613, %v2746
      %v2748 = vsel %vm2731, %v2620, %v2747
      %v2749 = vsel %vm2733, %v2627, %v2748
      %v2750 = vsel %vm2735, %v2634, %v2749
      %v2751 = vsel %vm2723, %v2648, %v2641
      %v2752 = vsel %vm2725, %v2655, %v2751
      %v2753 = vsel %vm2727, %v2662, %v2752
      %v2754 = vsel %vm2729, %v2669, %v2753
      %v2755 = vsel %vm2731, %v2676, %v2754
      %v2756 = vsel %vm2733, %v2683, %v2755
      %v2757 = vsel %vm2735, %v2690, %v2756
      %2762 = vst.msk [vmem:[%s248] sm:$0xff] %vm554, %v2736
      %2763 = vst.msk [vmem:[%s248 + $0x8] sm:$0xff] %vm554, %v2743
      %2764 = vst.msk [vmem:[%s248 + $0x10] sm:$0xff] %vm554, %v2750
      %2765 = vst.msk [vmem:[%s248 + $0x18] sm:$0xff] %vm554, %v2757
      %s2766 = smul.u32 4, %s16
      %p2767 = scmp.lt.s32.totalorder %s2766, 7
      %s2768 = scalar_select %p2767, %s2766, 7
      %s2769 = smul.addr %s2768, 8
      %s2770 = scalar_lea.vmem %s5, %s2769
      // Predicated region
      $region41: #{tpu_custom_call.1} parent=39 // pred_check
        %p2771 = pneg %p149
      $region42: #{tpu_custom_call.1} parent=39 // pred_check_branch
        %2773 = sbr.rel (%p2771) target = $region44
      $region43: #{tpu_custom_call.1} parent=39 // pred_region
        %s2774 = smul.u32 4, %s16
      $region44: #{tpu_custom_call.1} parent=39 // pred_fallthru
        _
    $region40: #{tpu_custom_call.1} parent=5 // pred_fallthru
      _
    %p2775 = scmp.le.s32.totalorder 2, %s11
    // Predicated region
    $region45: #{tpu_custom_call.1} parent=5 // pred_check
      %p2776 = pneg %p2775
    $region46: #{tpu_custom_call.1} parent=5 // pred_check_branch
      %2778 = sbr.rel (%p2776) target = $region48
    $region47: #{tpu_custom_call.1} parent=5 // pred_region
      %s2779 = ssub.s32 %s11, 2
      // Predicated region
      $region49: #{tpu_custom_call.1} parent=47 // pred_check
        %p2780 = pneg %p155
      $region50: #{tpu_custom_call.1} parent=47 // pred_check_branch
        %2782 = sbr.rel (%p2780) target = $region52
      $region51: #{tpu_custom_call.1} parent=47 // pred_region
        %s2783 = smul.u32 4, %s17
        %p2784 = scmp.lt.s32.totalorder %s2783, 7
        %s2785 = scalar_select %p2784, %s2783, 7
        %s2786 = smul.addr %s2785, 8
        %s2787 = scalar_lea.vmem %s5, %s2786
      $region52: #{tpu_custom_call.1} parent=47 // pred_fallthru
        _
    $region48: #{tpu_custom_call.1} parent=5 // pred_fallthru
      _
  $region6: #{tpu_custom_call.1} parent=0 // loop_footer
    %s15 = sadd.s32 1, %s11
  $region7: #{tpu_custom_call.1} parent=0 // loop_footer_branch
    %10 = sbr.rel target = $region3
  $region8: #{tpu_custom_call.1} parent=0 // loop_exit
    _

</llo_original>
